<compile_context>
chip_gen: v7x
topology: tpu7x:2x2x1
jax: 0.10.0
libtpu: 0.0.40
codegen_flags: <defaults>
</compile_context>

<pallas_src>
import jax
import jax.numpy as jnp
import numpy as np
from jax.experimental import pallas as pl
from jax.experimental.pallas import tpu as pltpu

_PREC = jax.lax.Precision.DEFAULT  # single-pass MXU, f32 accumulation via preferred_element_type


def gru_linear_kernel(x_ref, h0_ref, w_ref, b_ref, y_ref, hout_ref, h_all):
    TB, I = x_ref.shape            # (T*B, I)
    B, H = h0_ref.shape
    T = TB // B
    O = y_ref.shape[1]

    # --- Unpack the packed weight / bias slabs (static, 8-aligned row splits).
    w_ih = w_ref[:I, :]                          # (I, 3H)
    w_hh = w_ref[I:I + H, :]                     # (H, 3H)
    w_out = w_ref[I + H:, :O]                    # (H, O)   (padded lanes dropped)

    b_gi = b_ref[0:1, :]                         # (1, 3H)  = [b_ir+b_hr, b_iz+b_hz, b_in]
    b_hn = jnp.broadcast_to(b_ref[1:2, :H], (B, H))   # (B, H), hoisted out of the loop
    b_out = b_ref[2:3, :O]                       # (1, O)

    # --- (1) Hoisted input-side gate matmul: one (T*B, I) @ (I, 3H) MXU call.
    gi_all = jnp.dot(x_ref[...], w_ih,
                     preferred_element_type=jnp.float32, precision=_PREC) + b_gi

    # --- (2) Serial recurrence: only the (B,H)@(H,3H) matmul + gate math sit
    #         on the critical path.  T is small & static -> fully unrolled.
    h = h0_ref[...]                              # (B, H)
    for t in range(T):
        gi = gi_all[t * B:(t + 1) * B, :]        # static slice (B, 3H)
        gh = jnp.dot(h, w_hh,
                     preferred_element_type=jnp.float32, precision=_PREC)

        i_r, i_z, i_n = gi[:, :H], gi[:, H:2 * H], gi[:, 2 * H:]
        h_r, h_z, h_n = gh[:, :H], gh[:, H:2 * H], gh[:, 2 * H:]

        # PyTorch GRU equations (gate order r, z, n); biases pre-combined.
        r = jax.nn.sigmoid(i_r + h_r)
        z = jax.nn.sigmoid(i_z + h_z)
        n = jnp.tanh(i_n + r * (h_n + b_hn))
        h = (1.0 - z) * n + z * h

        # Off the dependence chain: hidden under the next step's matmul.
        h_all[t * B:(t + 1) * B, :] = h

    # Final hidden state written exactly once.
    hout_ref[...] = h.astype(hout_ref.dtype)

    # --- (3) Deferred Linear head: one (T*B, H) @ (H, O) matmul + one store.
    y = jnp.dot(h_all[...], w_out,
                preferred_element_type=jnp.float32, precision=_PREC) + b_out
    y_ref[...] = y.astype(y_ref.dtype)


def pack_params(params):
    """One-time parameter preparation: 2 packed operands instead of 6."""
    H = params["w_hh"].shape[0] // 3
    I = params["w_ih"].shape[1]
    O = params["w_out"].shape[0]
    G = 3 * H

    w_ih_t = params["w_ih"].T                    # (I, 3H)
    w_hh_t = params["w_hh"].T                    # (H, 3H)
    w_out_t = params["w_out"].T                  # (H, O)
    w_out_pad = jnp.pad(w_out_t, ((0, 0), (0, G - O)))          # (H, 3H)
    w_pack = jnp.concatenate([w_ih_t, w_hh_t, w_out_pad], 0)    # (I+2H, 3H)

    # Hidden-side bias folds into the input-side bias for r/z; b_hh_n stays
    # separate because PyTorch applies it inside r*(W_hn h + b_hn).
    b_ih, b_hh = params["b_ih"], params["b_hh"]
    b_gi = jnp.concatenate([b_ih[:2 * H] + b_hh[:2 * H], b_ih[2 * H:]])  # (3H,)
    b_pack = jnp.stack([
        b_gi,
        jnp.pad(b_hh[2 * H:], (0, G - H)),
        jnp.pad(params["b_out"], (0, G - O)),
    ], axis=0)                                   # (3, 3H)

    return {"w_pack": w_pack, "b_pack": b_pack, "sizes": (I, H, O)}


def relate_rnn_forward(x, hidden, packed):
    """x: (T, B, I) f32; hidden: (1, B, H) f32 -> (y (T,B,O), h_out (1,B,H))."""
    T, B, _ = x.shape
    _, H, O = packed["sizes"]

    x2 = x.reshape(T * B, x.shape[2])            # free reshape outside the kernel
    h0 = hidden[0]                               # (B, H)
    vmem = pl.BlockSpec(memory_space=pltpu.MemorySpace.VMEM)

    y2, h_out = pl.pallas_call(
        gru_linear_kernel,
        out_shape=(
            jax.ShapeDtypeStruct((T * B, O), jnp.float32),
            jax.ShapeDtypeStruct((B, H), jnp.float32),
        ),
        in_specs=[vmem, vmem, vmem, vmem],       # x, h0, W_pack, b_pack
        out_specs=(vmem, vmem),                  # y (flattened), final hidden
        scratch_shapes=[pltpu.VMEM((T * B, H), jnp.float32)],
    )(x2, h0, packed["w_pack"], packed["b_pack"])

    return y2.reshape(T, B, O), h_out[None]      # (T, B, O), (1, B, H)


def reference_forward(x, hidden, params):
    """Pure-JAX reference mirroring torch.nn.GRU + nn.Linear (original biases)."""
    H = params["w_hh"].shape[0] // 3
    w_ih, w_hh = params["w_ih"], params["w_hh"]
    b_ih, b_hh = params["b_ih"], params["b_hh"]

    def step(h, x_t):
        gi = x_t @ w_ih.T + b_ih
        gh = h @ w_hh.T + b_hh
        i_r, i_z, i_n = gi[:, :H], gi[:, H:2 * H], gi[:, 2 * H:]
        h_r, h_z, h_n = gh[:, :H], gh[:, H:2 * H], gh[:, 2 * H:]
        r = jax.nn.sigmoid(i_r + h_r)
        z = jax.nn.sigmoid(i_z + h_z)
        n = jnp.tanh(i_n + r * h_n)
        h_new = (1.0 - z) * n + z * h
        return h_new, h_new

    h_last, hs = jax.lax.scan(step, hidden[0], x)
    y = hs @ params["w_out"].T + params["b_out"]
    return y, h_last[None]


def init_params(key, inputsize, hiddensize, outputsize):
    """Deterministic init mimicking PyTorch uniform(-1/sqrt(H), 1/sqrt(H))."""
    ks = jax.random.split(key, 6)
    k_gru = 1.0 / np.sqrt(hiddensize)
    k_lin = 1.0 / np.sqrt(hiddensize)
    u = lambda k, shape, a: jax.random.uniform(k, shape, jnp.float32, -a, a)
    return {
        "w_ih": u(ks[0], (3 * hiddensize, inputsize), k_gru),
        "w_hh": u(ks[1], (3 * hiddensize, hiddensize), k_gru),
        "b_ih": u(ks[2], (3 * hiddensize,), k_gru),
        "b_hh": u(ks[3], (3 * hiddensize,), k_gru),
        "w_out": u(ks[4], (outputsize, hiddensize), k_lin),
        "b_out": u(ks[5], (outputsize,), k_lin),
    }


if __name__ == "__main__":
    # Small shapes consistent with the module's forward:
    #   seq=8, batch=2, inputsize=16, hiddensize=32, outputsize=8
    T, B, I, H, O = 8, 2, 16, 32, 8

    key = jax.random.PRNGKey(0)
    k_x, k_p = jax.random.split(key)
    x = jax.random.normal(k_x, (T, B, I), jnp.float32)
    hidden0 = jnp.zeros((1, B, H), jnp.float32)   # RelateRNN.initHidden (batch-broadcast)
    params = init_params(k_p, I, H, O)
    packed = pack_params(params)                  # one-time parameter prep

    y, h_out = relate_rnn_forward(x, hidden0, packed)
    y = jax.block_until_ready(y)
    h_out = jax.block_until_ready(h_out)

    y_ref, h_ref = reference_forward(x, hidden0, params)
    np.testing.assert_allclose(np.asarray(y), np.asarray(y_ref), rtol=1e-5, atol=1e-5)
    np.testing.assert_allclose(np.asarray(h_out), np.asarray(h_ref), rtol=1e-5, atol=1e-5)

    print("KERNEL_OK")
</pallas_src>

<mosaic_0001>
module attributes {stable_mosaic.version = 11 : i64} {
  func.func @gru_linear_kernel(%arg0: memref<16x16xf32, #tpu.memory_space<vmem>>, %arg1: memref<2x32xf32, #tpu.memory_space<vmem>>, %arg2: memref<80x96xf32, #tpu.memory_space<vmem>>, %arg3: memref<3x96xf32, #tpu.memory_space<vmem>>, %arg4: memref<16x8xf32, #tpu.memory_space<vmem>>, %arg5: memref<2x32xf32, #tpu.memory_space<vmem>>, %arg6: memref<16x32xf32, #tpu.memory_space<vmem>>) attributes {dimension_semantics = [], scalar_prefetch = 0 : i64, scratch_operands = 1 : i64, tpu.core_type = #tpu.core_type<tc>} {
    %c0 = arith.constant 0 : index
    %c0_0 = arith.constant 0 : index
    %0 = vector.load %arg2[%c0, %c0_0] : memref<80x96xf32, #tpu.memory_space<vmem>>, vector<16x96xf32>
    %c16 = arith.constant 16 : index
    %c0_1 = arith.constant 0 : index
    %1 = vector.load %arg2[%c16, %c0_1] : memref<80x96xf32, #tpu.memory_space<vmem>>, vector<32x96xf32>
    %c48 = arith.constant 48 : index
    %c0_2 = arith.constant 0 : index
    %2 = vector.load %arg2[%c48, %c0_2] : memref<80x96xf32, #tpu.memory_space<vmem>>, vector<32x8xf32>
    %c0_3 = arith.constant 0 : index
    %c0_4 = arith.constant 0 : index
    %3 = vector.load %arg3[%c0_3, %c0_4] : memref<3x96xf32, #tpu.memory_space<vmem>>, vector<1x96xf32>
    %c1 = arith.constant 1 : index
    %c0_5 = arith.constant 0 : index
    %4 = vector.load %arg3[%c1, %c0_5] : memref<3x96xf32, #tpu.memory_space<vmem>>, vector<1x32xf32>
    %5 = vector.shape_cast %4 : vector<1x32xf32> to vector<1x32xf32>
    %6 = vector.broadcast %5 : vector<1x32xf32> to vector<2x32xf32>
    %c2 = arith.constant 2 : index
    %c0_6 = arith.constant 0 : index
    %7 = vector.load %arg3[%c2, %c0_6] : memref<3x96xf32, #tpu.memory_space<vmem>>, vector<1x8xf32>
    %c0_7 = arith.constant 0 : index
    %c0_8 = arith.constant 0 : index
    %8 = vector.load %arg0[%c0_7, %c0_8] : memref<16x16xf32, #tpu.memory_space<vmem>>, vector<16x16xf32>
    %cst = arith.constant dense<0.000000e+00> : vector<16x96xf32>
    %9 = tpu.matmul %8, %0, %cst {dimension_numbers = #tpu.dot_dimension_numbers<[1], [0], [0], [1], [0, 0, 1, 1], [], []>} : vector<16x16xf32>, vector<16x96xf32>, vector<16x96xf32> -> vector<16x96xf32>
    %10 = vector.broadcast %3 : vector<1x96xf32> to vector<16x96xf32>
    %11 = arith.addf %9, %10 : vector<16x96xf32>
    %c0_9 = arith.constant 0 : index
    %c0_10 = arith.constant 0 : index
    %12 = vector.load %arg1[%c0_9, %c0_10] : memref<2x32xf32, #tpu.memory_space<vmem>>, vector<2x32xf32>
    %13 = vector.extract_strided_slice %11 {offsets = [0, 0], sizes = [2, 96], strides = [1, 1]} : vector<16x96xf32> to vector<2x96xf32>
    %cst_11 = arith.constant dense<0.000000e+00> : vector<2x96xf32>
    %14 = tpu.matmul %12, %1, %cst_11 {dimension_numbers = #tpu.dot_dimension_numbers<[1], [0], [0], [1], [0, 0, 1, 1], [], []>} : vector<2x32xf32>, vector<32x96xf32>, vector<2x96xf32> -> vector<2x96xf32>
    %15 = vector.extract_strided_slice %13 {offsets = [0, 0], sizes = [2, 32], strides = [1, 1]} : vector<2x96xf32> to vector<2x32xf32>
    %16 = vector.extract_strided_slice %13 {offsets = [0, 32], sizes = [2, 32], strides = [1, 1]} : vector<2x96xf32> to vector<2x32xf32>
    %17 = vector.extract_strided_slice %13 {offsets = [0, 64], sizes = [2, 32], strides = [1, 1]} : vector<2x96xf32> to vector<2x32xf32>
    %18 = vector.extract_strided_slice %14 {offsets = [0, 0], sizes = [2, 32], strides = [1, 1]} : vector<2x96xf32> to vector<2x32xf32>
    %19 = vector.extract_strided_slice %14 {offsets = [0, 32], sizes = [2, 32], strides = [1, 1]} : vector<2x96xf32> to vector<2x32xf32>
    %20 = vector.extract_strided_slice %14 {offsets = [0, 64], sizes = [2, 32], strides = [1, 1]} : vector<2x96xf32> to vector<2x32xf32>
    %21 = arith.addf %15, %18 : vector<2x32xf32>
    %22 = arith.negf %21 : vector<2x32xf32>
    %23 = math.exp %22 : vector<2x32xf32>
    %cst_12 = arith.constant 1.000000e+00 : f32
    %24 = vector.broadcast %cst_12 : f32 to vector<2x32xf32>
    %25 = arith.addf %24, %23 : vector<2x32xf32>
    %26 = arith.divf %24, %25 : vector<2x32xf32>
    %27 = arith.addf %16, %19 : vector<2x32xf32>
    %28 = arith.negf %27 : vector<2x32xf32>
    %29 = math.exp %28 : vector<2x32xf32>
    %cst_13 = arith.constant 1.000000e+00 : f32
    %30 = vector.broadcast %cst_13 : f32 to vector<2x32xf32>
    %31 = arith.addf %30, %29 : vector<2x32xf32>
    %32 = arith.divf %30, %31 : vector<2x32xf32>
    %33 = arith.addf %20, %6 : vector<2x32xf32>
    %34 = arith.mulf %26, %33 : vector<2x32xf32>
    %35 = arith.addf %17, %34 : vector<2x32xf32>
    %36 = math.tanh %35 : vector<2x32xf32>
    %cst_14 = arith.constant 1.000000e+00 : f32
    %37 = vector.broadcast %cst_14 : f32 to vector<2x32xf32>
    %38 = arith.subf %37, %32 : vector<2x32xf32>
    %39 = arith.mulf %38, %36 : vector<2x32xf32>
    %40 = arith.mulf %32, %12 : vector<2x32xf32>
    %41 = arith.addf %39, %40 : vector<2x32xf32>
    %c0_15 = arith.constant 0 : index
    %c0_16 = arith.constant 0 : index
    %42 = vector.load %arg6[%c0_15, %c0_16] : memref<16x32xf32, #tpu.memory_space<vmem>>, vector<2x32xf32>
    tpu.vector_store %arg6[%c0_15, %c0_16], %41 {strides = array<i32>} : memref<16x32xf32, #tpu.memory_space<vmem>>, vector<2x32xf32>,
    %43 = vector.extract_strided_slice %11 {offsets = [2, 0], sizes = [2, 96], strides = [1, 1]} : vector<16x96xf32> to vector<2x96xf32>
    %cst_17 = arith.constant dense<0.000000e+00> : vector<2x96xf32>
    %44 = tpu.matmul %41, %1, %cst_17 {dimension_numbers = #tpu.dot_dimension_numbers<[1], [0], [0], [1], [0, 0, 1, 1], [], []>} : vector<2x32xf32>, vector<32x96xf32>, vector<2x96xf32> -> vector<2x96xf32>
    %45 = vector.extract_strided_slice %43 {offsets = [0, 0], sizes = [2, 32], strides = [1, 1]} : vector<2x96xf32> to vector<2x32xf32>
    %46 = vector.extract_strided_slice %43 {offsets = [0, 32], sizes = [2, 32], strides = [1, 1]} : vector<2x96xf32> to vector<2x32xf32>
    %47 = vector.extract_strided_slice %43 {offsets = [0, 64], sizes = [2, 32], strides = [1, 1]} : vector<2x96xf32> to vector<2x32xf32>
    %48 = vector.extract_strided_slice %44 {offsets = [0, 0], sizes = [2, 32], strides = [1, 1]} : vector<2x96xf32> to vector<2x32xf32>
    %49 = vector.extract_strided_slice %44 {offsets = [0, 32], sizes = [2, 32], strides = [1, 1]} : vector<2x96xf32> to vector<2x32xf32>
    %50 = vector.extract_strided_slice %44 {offsets = [0, 64], sizes = [2, 32], strides = [1, 1]} : vector<2x96xf32> to vector<2x32xf32>
    %51 = arith.addf %45, %48 : vector<2x32xf32>
    %52 = arith.negf %51 : vector<2x32xf32>
    %53 = math.exp %52 : vector<2x32xf32>
    %cst_18 = arith.constant 1.000000e+00 : f32
    %54 = vector.broadcast %cst_18 : f32 to vector<2x32xf32>
    %55 = arith.addf %54, %53 : vector<2x32xf32>
    %56 = arith.divf %54, %55 : vector<2x32xf32>
    %57 = arith.addf %46, %49 : vector<2x32xf32>
    %58 = arith.negf %57 : vector<2x32xf32>
    %59 = math.exp %58 : vector<2x32xf32>
    %cst_19 = arith.constant 1.000000e+00 : f32
    %60 = vector.broadcast %cst_19 : f32 to vector<2x32xf32>
    %61 = arith.addf %60, %59 : vector<2x32xf32>
    %62 = arith.divf %60, %61 : vector<2x32xf32>
    %63 = arith.addf %50, %6 : vector<2x32xf32>
    %64 = arith.mulf %56, %63 : vector<2x32xf32>
    %65 = arith.addf %47, %64 : vector<2x32xf32>
    %66 = math.tanh %65 : vector<2x32xf32>
    %cst_20 = arith.constant 1.000000e+00 : f32
    %67 = vector.broadcast %cst_20 : f32 to vector<2x32xf32>
    %68 = arith.subf %67, %62 : vector<2x32xf32>
    %69 = arith.mulf %68, %66 : vector<2x32xf32>
    %70 = arith.mulf %62, %41 : vector<2x32xf32>
    %71 = arith.addf %69, %70 : vector<2x32xf32>
    %c2_21 = arith.constant 2 : index
    %c0_22 = arith.constant 0 : index
    %72 = vector.load %arg6[%c2_21, %c0_22] : memref<16x32xf32, #tpu.memory_space<vmem>>, vector<2x32xf32>
    tpu.vector_store %arg6[%c2_21, %c0_22], %71 {strides = array<i32>} : memref<16x32xf32, #tpu.memory_space<vmem>>, vector<2x32xf32>,
    %73 = vector.extract_strided_slice %11 {offsets = [4, 0], sizes = [2, 96], strides = [1, 1]} : vector<16x96xf32> to vector<2x96xf32>
    %cst_23 = arith.constant dense<0.000000e+00> : vector<2x96xf32>
    %74 = tpu.matmul %71, %1, %cst_23 {dimension_numbers = #tpu.dot_dimension_numbers<[1], [0], [0], [1], [0, 0, 1, 1], [], []>} : vector<2x32xf32>, vector<32x96xf32>, vector<2x96xf32> -> vector<2x96xf32>
    %75 = vector.extract_strided_slice %73 {offsets = [0, 0], sizes = [2, 32], strides = [1, 1]} : vector<2x96xf32> to vector<2x32xf32>
    %76 = vector.extract_strided_slice %73 {offsets = [0, 32], sizes = [2, 32], strides = [1, 1]} : vector<2x96xf32> to vector<2x32xf32>
    %77 = vector.extract_strided_slice %73 {offsets = [0, 64], sizes = [2, 32], strides = [1, 1]} : vector<2x96xf32> to vector<2x32xf32>
    %78 = vector.extract_strided_slice %74 {offsets = [0, 0], sizes = [2, 32], strides = [1, 1]} : vector<2x96xf32> to vector<2x32xf32>
    %79 = vector.extract_strided_slice %74 {offsets = [0, 32], sizes = [2, 32], strides = [1, 1]} : vector<2x96xf32> to vector<2x32xf32>
    %80 = vector.extract_strided_slice %74 {offsets = [0, 64], sizes = [2, 32], strides = [1, 1]} : vector<2x96xf32> to vector<2x32xf32>
    %81 = arith.addf %75, %78 : vector<2x32xf32>
    %82 = arith.negf %81 : vector<2x32xf32>
    %83 = math.exp %82 : vector<2x32xf32>
    %cst_24 = arith.constant 1.000000e+00 : f32
    %84 = vector.broadcast %cst_24 : f32 to vector<2x32xf32>
    %85 = arith.addf %84, %83 : vector<2x32xf32>
    %86 = arith.divf %84, %85 : vector<2x32xf32>
    %87 = arith.addf %76, %79 : vector<2x32xf32>
    %88 = arith.negf %87 : vector<2x32xf32>
    %89 = math.exp %88 : vector<2x32xf32>
    %cst_25 = arith.constant 1.000000e+00 : f32
    %90 = vector.broadcast %cst_25 : f32 to vector<2x32xf32>
    %91 = arith.addf %90, %89 : vector<2x32xf32>
    %92 = arith.divf %90, %91 : vector<2x32xf32>
    %93 = arith.addf %80, %6 : vector<2x32xf32>
    %94 = arith.mulf %86, %93 : vector<2x32xf32>
    %95 = arith.addf %77, %94 : vector<2x32xf32>
    %96 = math.tanh %95 : vector<2x32xf32>
    %cst_26 = arith.constant 1.000000e+00 : f32
    %97 = vector.broadcast %cst_26 : f32 to vector<2x32xf32>
    %98 = arith.subf %97, %92 : vector<2x32xf32>
    %99 = arith.mulf %98, %96 : vector<2x32xf32>
    %100 = arith.mulf %92, %71 : vector<2x32xf32>
    %101 = arith.addf %99, %100 : vector<2x32xf32>
    %c4 = arith.constant 4 : index
    %c0_27 = arith.constant 0 : index
    %102 = vector.load %arg6[%c4, %c0_27] : memref<16x32xf32, #tpu.memory_space<vmem>>, vector<2x32xf32>
    tpu.vector_store %arg6[%c4, %c0_27], %101 {strides = array<i32>} : memref<16x32xf32, #tpu.memory_space<vmem>>, vector<2x32xf32>,
    %103 = vector.extract_strided_slice %11 {offsets = [6, 0], sizes = [2, 96], strides = [1, 1]} : vector<16x96xf32> to vector<2x96xf32>
    %cst_28 = arith.constant dense<0.000000e+00> : vector<2x96xf32>
    %104 = tpu.matmul %101, %1, %cst_28 {dimension_numbers = #tpu.dot_dimension_numbers<[1], [0], [0], [1], [0, 0, 1, 1], [], []>} : vector<2x32xf32>, vector<32x96xf32>, vector<2x96xf32> -> vector<2x96xf32>
    %105 = vector.extract_strided_slice %103 {offsets = [0, 0], sizes = [2, 32], strides = [1, 1]} : vector<2x96xf32> to vector<2x32xf32>
    %106 = vector.extract_strided_slice %103 {offsets = [0, 32], sizes = [2, 32], strides = [1, 1]} : vector<2x96xf32> to vector<2x32xf32>
    %107 = vector.extract_strided_slice %103 {offsets = [0, 64], sizes = [2, 32], strides = [1, 1]} : vector<2x96xf32> to vector<2x32xf32>
    %108 = vector.extract_strided_slice %104 {offsets = [0, 0], sizes = [2, 32], strides = [1, 1]} : vector<2x96xf32> to vector<2x32xf32>
    %109 = vector.extract_strided_slice %104 {offsets = [0, 32], sizes = [2, 32], strides = [1, 1]} : vector<2x96xf32> to vector<2x32xf32>
    %110 = vector.extract_strided_slice %104 {offsets = [0, 64], sizes = [2, 32], strides = [1, 1]} : vector<2x96xf32> to vector<2x32xf32>
    %111 = arith.addf %105, %108 : vector<2x32xf32>
    %112 = arith.negf %111 : vector<2x32xf32>
    %113 = math.exp %112 : vector<2x32xf32>
    %cst_29 = arith.constant 1.000000e+00 : f32
    %114 = vector.broadcast %cst_29 : f32 to vector<2x32xf32>
    %115 = arith.addf %114, %113 : vector<2x32xf32>
    %116 = arith.divf %114, %115 : vector<2x32xf32>
    %117 = arith.addf %106, %109 : vector<2x32xf32>
    %118 = arith.negf %117 : vector<2x32xf32>
    %119 = math.exp %118 : vector<2x32xf32>
    %cst_30 = arith.constant 1.000000e+00 : f32
    %120 = vector.broadcast %cst_30 : f32 to vector<2x32xf32>
    %121 = arith.addf %120, %119 : vector<2x32xf32>
    %122 = arith.divf %120, %121 : vector<2x32xf32>
    %123 = arith.addf %110, %6 : vector<2x32xf32>
    %124 = arith.mulf %116, %123 : vector<2x32xf32>
    %125 = arith.addf %107, %124 : vector<2x32xf32>
    %126 = math.tanh %125 : vector<2x32xf32>
    %cst_31 = arith.constant 1.000000e+00 : f32
    %127 = vector.broadcast %cst_31 : f32 to vector<2x32xf32>
    %128 = arith.subf %127, %122 : vector<2x32xf32>
    %129 = arith.mulf %128, %126 : vector<2x32xf32>
    %130 = arith.mulf %122, %101 : vector<2x32xf32>
    %131 = arith.addf %129, %130 : vector<2x32xf32>
    %c6 = arith.constant 6 : index
    %c0_32 = arith.constant 0 : index
    %132 = vector.load %arg6[%c6, %c0_32] : memref<16x32xf32, #tpu.memory_space<vmem>>, vector<2x32xf32>
    tpu.vector_store %arg6[%c6, %c0_32], %131 {strides = array<i32>} : memref<16x32xf32, #tpu.memory_space<vmem>>, vector<2x32xf32>,
    %133 = vector.extract_strided_slice %11 {offsets = [8, 0], sizes = [2, 96], strides = [1, 1]} : vector<16x96xf32> to vector<2x96xf32>
    %cst_33 = arith.constant dense<0.000000e+00> : vector<2x96xf32>
    %134 = tpu.matmul %131, %1, %cst_33 {dimension_numbers = #tpu.dot_dimension_numbers<[1], [0], [0], [1], [0, 0, 1, 1], [], []>} : vector<2x32xf32>, vector<32x96xf32>, vector<2x96xf32> -> vector<2x96xf32>
    %135 = vector.extract_strided_slice %133 {offsets = [0, 0], sizes = [2, 32], strides = [1, 1]} : vector<2x96xf32> to vector<2x32xf32>
    %136 = vector.extract_strided_slice %133 {offsets = [0, 32], sizes = [2, 32], strides = [1, 1]} : vector<2x96xf32> to vector<2x32xf32>
    %137 = vector.extract_strided_slice %133 {offsets = [0, 64], sizes = [2, 32], strides = [1, 1]} : vector<2x96xf32> to vector<2x32xf32>
    %138 = vector.extract_strided_slice %134 {offsets = [0, 0], sizes = [2, 32], strides = [1, 1]} : vector<2x96xf32> to vector<2x32xf32>
    %139 = vector.extract_strided_slice %134 {offsets = [0, 32], sizes = [2, 32], strides = [1, 1]} : vector<2x96xf32> to vector<2x32xf32>
    %140 = vector.extract_strided_slice %134 {offsets = [0, 64], sizes = [2, 32], strides = [1, 1]} : vector<2x96xf32> to vector<2x32xf32>
    %141 = arith.addf %135, %138 : vector<2x32xf32>
    %142 = arith.negf %141 : vector<2x32xf32>
    %143 = math.exp %142 : vector<2x32xf32>
    %cst_34 = arith.constant 1.000000e+00 : f32
    %144 = vector.broadcast %cst_34 : f32 to vector<2x32xf32>
    %145 = arith.addf %144, %143 : vector<2x32xf32>
    %146 = arith.divf %144, %145 : vector<2x32xf32>
    %147 = arith.addf %136, %139 : vector<2x32xf32>
    %148 = arith.negf %147 : vector<2x32xf32>
    %149 = math.exp %148 : vector<2x32xf32>
    %cst_35 = arith.constant 1.000000e+00 : f32
    %150 = vector.broadcast %cst_35 : f32 to vector<2x32xf32>
    %151 = arith.addf %150, %149 : vector<2x32xf32>
    %152 = arith.divf %150, %151 : vector<2x32xf32>
    %153 = arith.addf %140, %6 : vector<2x32xf32>
    %154 = arith.mulf %146, %153 : vector<2x32xf32>
    %155 = arith.addf %137, %154 : vector<2x32xf32>
    %156 = math.tanh %155 : vector<2x32xf32>
    %cst_36 = arith.constant 1.000000e+00 : f32
    %157 = vector.broadcast %cst_36 : f32 to vector<2x32xf32>
    %158 = arith.subf %157, %152 : vector<2x32xf32>
    %159 = arith.mulf %158, %156 : vector<2x32xf32>
    %160 = arith.mulf %152, %131 : vector<2x32xf32>
    %161 = arith.addf %159, %160 : vector<2x32xf32>
    %c8 = arith.constant 8 : index
    %c0_37 = arith.constant 0 : index
    %162 = vector.load %arg6[%c8, %c0_37] : memref<16x32xf32, #tpu.memory_space<vmem>>, vector<2x32xf32>
    tpu.vector_store %arg6[%c8, %c0_37], %161 {strides = array<i32>} : memref<16x32xf32, #tpu.memory_space<vmem>>, vector<2x32xf32>,
    %163 = vector.extract_strided_slice %11 {offsets = [10, 0], sizes = [2, 96], strides = [1, 1]} : vector<16x96xf32> to vector<2x96xf32>
    %cst_38 = arith.constant dense<0.000000e+00> : vector<2x96xf32>
    %164 = tpu.matmul %161, %1, %cst_38 {dimension_numbers = #tpu.dot_dimension_numbers<[1], [0], [0], [1], [0, 0, 1, 1], [], []>} : vector<2x32xf32>, vector<32x96xf32>, vector<2x96xf32> -> vector<2x96xf32>
    %165 = vector.extract_strided_slice %163 {offsets = [0, 0], sizes = [2, 32], strides = [1, 1]} : vector<2x96xf32> to vector<2x32xf32>
    %166 = vector.extract_strided_slice %163 {offsets = [0, 32], sizes = [2, 32], strides = [1, 1]} : vector<2x96xf32> to vector<2x32xf32>
    %167 = vector.extract_strided_slice %163 {offsets = [0, 64], sizes = [2, 32], strides = [1, 1]} : vector<2x96xf32> to vector<2x32xf32>
    %168 = vector.extract_strided_slice %164 {offsets = [0, 0], sizes = [2, 32], strides = [1, 1]} : vector<2x96xf32> to vector<2x32xf32>
    %169 = vector.extract_strided_slice %164 {offsets = [0, 32], sizes = [2, 32], strides = [1, 1]} : vector<2x96xf32> to vector<2x32xf32>
    %170 = vector.extract_strided_slice %164 {offsets = [0, 64], sizes = [2, 32], strides = [1, 1]} : vector<2x96xf32> to vector<2x32xf32>
    %171 = arith.addf %165, %168 : vector<2x32xf32>
    %172 = arith.negf %171 : vector<2x32xf32>
    %173 = math.exp %172 : vector<2x32xf32>
    %cst_39 = arith.constant 1.000000e+00 : f32
    %174 = vector.broadcast %cst_39 : f32 to vector<2x32xf32>
    %175 = arith.addf %174, %173 : vector<2x32xf32>
    %176 = arith.divf %174, %175 : vector<2x32xf32>
    %177 = arith.addf %166, %169 : vector<2x32xf32>
    %178 = arith.negf %177 : vector<2x32xf32>
    %179 = math.exp %178 : vector<2x32xf32>
    %cst_40 = arith.constant 1.000000e+00 : f32
    %180 = vector.broadcast %cst_40 : f32 to vector<2x32xf32>
    %181 = arith.addf %180, %179 : vector<2x32xf32>
    %182 = arith.divf %180, %181 : vector<2x32xf32>
    %183 = arith.addf %170, %6 : vector<2x32xf32>
    %184 = arith.mulf %176, %183 : vector<2x32xf32>
    %185 = arith.addf %167, %184 : vector<2x32xf32>
    %186 = math.tanh %185 : vector<2x32xf32>
    %cst_41 = arith.constant 1.000000e+00 : f32
    %187 = vector.broadcast %cst_41 : f32 to vector<2x32xf32>
    %188 = arith.subf %187, %182 : vector<2x32xf32>
    %189 = arith.mulf %188, %186 : vector<2x32xf32>
    %190 = arith.mulf %182, %161 : vector<2x32xf32>
    %191 = arith.addf %189, %190 : vector<2x32xf32>
    %c10 = arith.constant 10 : index
    %c0_42 = arith.constant 0 : index
    %192 = vector.load %arg6[%c10, %c0_42] : memref<16x32xf32, #tpu.memory_space<vmem>>, vector<2x32xf32>
    tpu.vector_store %arg6[%c10, %c0_42], %191 {strides = array<i32>} : memref<16x32xf32, #tpu.memory_space<vmem>>, vector<2x32xf32>,
    %193 = vector.extract_strided_slice %11 {offsets = [12, 0], sizes = [2, 96], strides = [1, 1]} : vector<16x96xf32> to vector<2x96xf32>
    %cst_43 = arith.constant dense<0.000000e+00> : vector<2x96xf32>
    %194 = tpu.matmul %191, %1, %cst_43 {dimension_numbers = #tpu.dot_dimension_numbers<[1], [0], [0], [1], [0, 0, 1, 1], [], []>} : vector<2x32xf32>, vector<32x96xf32>, vector<2x96xf32> -> vector<2x96xf32>
    %195 = vector.extract_strided_slice %193 {offsets = [0, 0], sizes = [2, 32], strides = [1, 1]} : vector<2x96xf32> to vector<2x32xf32>
    %196 = vector.extract_strided_slice %193 {offsets = [0, 32], sizes = [2, 32], strides = [1, 1]} : vector<2x96xf32> to vector<2x32xf32>
    %197 = vector.extract_strided_slice %193 {offsets = [0, 64], sizes = [2, 32], strides = [1, 1]} : vector<2x96xf32> to vector<2x32xf32>
    %198 = vector.extract_strided_slice %194 {offsets = [0, 0], sizes = [2, 32], strides = [1, 1]} : vector<2x96xf32> to vector<2x32xf32>
    %199 = vector.extract_strided_slice %194 {offsets = [0, 32], sizes = [2, 32], strides = [1, 1]} : vector<2x96xf32> to vector<2x32xf32>
    %200 = vector.extract_strided_slice %194 {offsets = [0, 64], sizes = [2, 32], strides = [1, 1]} : vector<2x96xf32> to vector<2x32xf32>
    %201 = arith.addf %195, %198 : vector<2x32xf32>
    %202 = arith.negf %201 : vector<2x32xf32>
    %203 = math.exp %202 : vector<2x32xf32>
    %cst_44 = arith.constant 1.000000e+00 : f32
    %204 = vector.broadcast %cst_44 : f32 to vector<2x32xf32>
    %205 = arith.addf %204, %203 : vector<2x32xf32>
    %206 = arith.divf %204, %205 : vector<2x32xf32>
    %207 = arith.addf %196, %199 : vector<2x32xf32>
    %208 = arith.negf %207 : vector<2x32xf32>
    %209 = math.exp %208 : vector<2x32xf32>
    %cst_45 = arith.constant 1.000000e+00 : f32
    %210 = vector.broadcast %cst_45 : f32 to vector<2x32xf32>
    %211 = arith.addf %210, %209 : vector<2x32xf32>
    %212 = arith.divf %210, %211 : vector<2x32xf32>
    %213 = arith.addf %200, %6 : vector<2x32xf32>
    %214 = arith.mulf %206, %213 : vector<2x32xf32>
    %215 = arith.addf %197, %214 : vector<2x32xf32>
    %216 = math.tanh %215 : vector<2x32xf32>
    %cst_46 = arith.constant 1.000000e+00 : f32
    %217 = vector.broadcast %cst_46 : f32 to vector<2x32xf32>
    %218 = arith.subf %217, %212 : vector<2x32xf32>
    %219 = arith.mulf %218, %216 : vector<2x32xf32>
    %220 = arith.mulf %212, %191 : vector<2x32xf32>
    %221 = arith.addf %219, %220 : vector<2x32xf32>
    %c12 = arith.constant 12 : index
    %c0_47 = arith.constant 0 : index
    %222 = vector.load %arg6[%c12, %c0_47] : memref<16x32xf32, #tpu.memory_space<vmem>>, vector<2x32xf32>
    tpu.vector_store %arg6[%c12, %c0_47], %221 {strides = array<i32>} : memref<16x32xf32, #tpu.memory_space<vmem>>, vector<2x32xf32>,
    %223 = vector.extract_strided_slice %11 {offsets = [14, 0], sizes = [2, 96], strides = [1, 1]} : vector<16x96xf32> to vector<2x96xf32>
    %cst_48 = arith.constant dense<0.000000e+00> : vector<2x96xf32>
    %224 = tpu.matmul %221, %1, %cst_48 {dimension_numbers = #tpu.dot_dimension_numbers<[1], [0], [0], [1], [0, 0, 1, 1], [], []>} : vector<2x32xf32>, vector<32x96xf32>, vector<2x96xf32> -> vector<2x96xf32>
    %225 = vector.extract_strided_slice %223 {offsets = [0, 0], sizes = [2, 32], strides = [1, 1]} : vector<2x96xf32> to vector<2x32xf32>
    %226 = vector.extract_strided_slice %223 {offsets = [0, 32], sizes = [2, 32], strides = [1, 1]} : vector<2x96xf32> to vector<2x32xf32>
    %227 = vector.extract_strided_slice %223 {offsets = [0, 64], sizes = [2, 32], strides = [1, 1]} : vector<2x96xf32> to vector<2x32xf32>
    %228 = vector.extract_strided_slice %224 {offsets = [0, 0], sizes = [2, 32], strides = [1, 1]} : vector<2x96xf32> to vector<2x32xf32>
    %229 = vector.extract_strided_slice %224 {offsets = [0, 32], sizes = [2, 32], strides = [1, 1]} : vector<2x96xf32> to vector<2x32xf32>
    %230 = vector.extract_strided_slice %224 {offsets = [0, 64], sizes = [2, 32], strides = [1, 1]} : vector<2x96xf32> to vector<2x32xf32>
    %231 = arith.addf %225, %228 : vector<2x32xf32>
    %232 = arith.negf %231 : vector<2x32xf32>
    %233 = math.exp %232 : vector<2x32xf32>
    %cst_49 = arith.constant 1.000000e+00 : f32
    %234 = vector.broadcast %cst_49 : f32 to vector<2x32xf32>
    %235 = arith.addf %234, %233 : vector<2x32xf32>
    %236 = arith.divf %234, %235 : vector<2x32xf32>
    %237 = arith.addf %226, %229 : vector<2x32xf32>
    %238 = arith.negf %237 : vector<2x32xf32>
    %239 = math.exp %238 : vector<2x32xf32>
    %cst_50 = arith.constant 1.000000e+00 : f32
    %240 = vector.broadcast %cst_50 : f32 to vector<2x32xf32>
    %241 = arith.addf %240, %239 : vector<2x32xf32>
    %242 = arith.divf %240, %241 : vector<2x32xf32>
    %243 = arith.addf %230, %6 : vector<2x32xf32>
    %244 = arith.mulf %236, %243 : vector<2x32xf32>
    %245 = arith.addf %227, %244 : vector<2x32xf32>
    %246 = math.tanh %245 : vector<2x32xf32>
    %cst_51 = arith.constant 1.000000e+00 : f32
    %247 = vector.broadcast %cst_51 : f32 to vector<2x32xf32>
    %248 = arith.subf %247, %242 : vector<2x32xf32>
    %249 = arith.mulf %248, %246 : vector<2x32xf32>
    %250 = arith.mulf %242, %221 : vector<2x32xf32>
    %251 = arith.addf %249, %250 : vector<2x32xf32>
    %c14 = arith.constant 14 : index
    %c0_52 = arith.constant 0 : index
    %252 = vector.load %arg6[%c14, %c0_52] : memref<16x32xf32, #tpu.memory_space<vmem>>, vector<2x32xf32>
    tpu.vector_store %arg6[%c14, %c0_52], %251 {strides = array<i32>} : memref<16x32xf32, #tpu.memory_space<vmem>>, vector<2x32xf32>,
    %c0_53 = arith.constant 0 : index
    %c0_54 = arith.constant 0 : index
    %253 = vector.load %arg5[%c0_53, %c0_54] : memref<2x32xf32, #tpu.memory_space<vmem>>, vector<2x32xf32>
    tpu.vector_store %arg5[%c0_53, %c0_54], %251 {strides = array<i32>} : memref<2x32xf32, #tpu.memory_space<vmem>>, vector<2x32xf32>,
    %c0_55 = arith.constant 0 : index
    %c0_56 = arith.constant 0 : index
    %254 = vector.load %arg6[%c0_55, %c0_56] : memref<16x32xf32, #tpu.memory_space<vmem>>, vector<16x32xf32>
    %cst_57 = arith.constant dense<0.000000e+00> : vector<16x8xf32>
    %255 = tpu.matmul %254, %2, %cst_57 {dimension_numbers = #tpu.dot_dimension_numbers<[1], [0], [0], [1], [0, 0, 1, 1], [], []>} : vector<16x32xf32>, vector<32x8xf32>, vector<16x8xf32> -> vector<16x8xf32>
    %256 = vector.broadcast %7 : vector<1x8xf32> to vector<16x8xf32>
    %257 = arith.addf %255, %256 : vector<16x8xf32>
    %c0_58 = arith.constant 0 : index
    %c0_59 = arith.constant 0 : index
    %258 = vector.load %arg4[%c0_58, %c0_59] : memref<16x8xf32, #tpu.memory_space<vmem>>, vector<16x8xf32>
    tpu.vector_store %arg4[%c0_58, %c0_59], %257 {strides = array<i32>} : memref<16x8xf32, #tpu.memory_space<vmem>>, vector<16x8xf32>,
    return
  }
}

</mosaic_0001>

<llo_original>
// kernel: tpu_custom_call.1
$region0: #{tpu_custom_call.1}
  #allocation0 [shape = 'u32[]', space=smem, size = 0x4, offset = 0x4, fixed_abs, tag = 'smem constant byte address 0x4 - core index']
  #allocation1 [shape = 'u32[144,128]{1,0:T(1,128)}', space=vmem, size = 0x12000, scoped, tag = 'internal scratch']
  #allocation2 [shape = 'f32[16,32]{1,0:T(8,128)}', space=vmem, size = 0x2000, scoped, tag = 'scratch operand']
  %s0 = inlined_call_operand.hbm [shape: f32[16,16], index: 0, kind: input, shape index: {}]
  %s1 = inlined_call_operand.vmem [shape: f32[2,32], index: 1, kind: input, shape index: {}]
  %s2 = inlined_call_operand.hbm [shape: f32[80,96], index: 2, kind: input, shape index: {}]
  %s3 = inlined_call_operand.vmem [shape: f32[3,96], index: 3, kind: input, shape index: {}]
  %s4 = inlined_call_operand.vmem [shape: f32[16,8], index: 4, kind: output, shape index: {0}]
  %s5 = inlined_call_operand.hbm [shape: f32[2,32], index: 5, kind: output, shape index: {1}]
  %6 = xla_tuple %s4, %s5
  %s7 = sld [smem:[#allocation0]]
  $region42: #{tpu_custom_call.1} parent=0
    _
  %s9 = ssub.s32 1, %s7
  %s10 = scalar_select 0, %s9, %s7
  $region1: #{tpu_custom_call.1} parent=0
    #allocation3 [shape = 'u8[8192]{0}', space=vmem, size = 0x2000, scoped, tag = 'input window, operand 0, single buffered']
    #allocation4 [shape = 's32[1]{0}', space=sflag, size = 0x4, scoped, tag = 'scoped memory for tpu_custom_call.1']
    #allocation5 [shape = 's32[1]{0}', space=sflag, size = 0x4, scoped, tag = 'scoped memory for tpu_custom_call.1']
    #allocation6 [shape = 'u8[40960]{0}', space=vmem, size = 0xa000, scoped, tag = 'input window, operand 2, single buffered']
    #allocation7 [shape = 's32[1]{0}', space=sflag, size = 0x4, scoped, tag = 'scoped memory for tpu_custom_call.1']
    #allocation8 [shape = 'u8[1024]{0}', space=vmem, size = 0x400, scoped, tag = 'output window, operand 1, single buffered']
    %11 = vsyncpa [#allocation4], 0
    %12 = vsyncpa [#allocation7], 0
    %13 = vsyncpa [#allocation5], 0
    // Predicated region
    $region2: #{tpu_custom_call.1} parent=1 // pred_check
      _
    $region3: #{tpu_custom_call.1} parent=1 // pred_check_branch
      %15 = sbr.rel (0) target = $region5
    $region4: #{tpu_custom_call.1} parent=1 // pred_region
      %s17 = ssub.s32 256, 256
      %18 = vsyncadd [#allocation4], %s17
      %s19 = sshll.u32 [#allocation3], 4
      %s20 = int_to_ptr.vmem [resolvable:$true] %s19
      %25 = dma.hbm_to_vmem [thread:$0]  %s0, 256, %s20, [#allocation4], 128, 128, 8
    $region5: #{tpu_custom_call.1} parent=1 // pred_fallthru
      _
    // Predicated region
    $region6: #{tpu_custom_call.1} parent=1 // pred_check
      _
    $region7: #{tpu_custom_call.1} parent=1 // pred_check_branch
      %27 = sbr.rel (0) target = $region9
    $region8: #{tpu_custom_call.1} parent=1 // pred_region
      _
    $region9: #{tpu_custom_call.1} parent=1 // pred_fallthru
      _
    // Predicated region
    $region10: #{tpu_custom_call.1} parent=1 // pred_check
      _
    $region11: #{tpu_custom_call.1} parent=1 // pred_check_branch
      %29 = sbr.rel (0) target = $region13
    $region12: #{tpu_custom_call.1} parent=1 // pred_region
      %s31 = ssub.s32 1280, 1280
      %32 = vsyncadd [#allocation7], %s31
      %s33 = sshll.u32 [#allocation6], 4
      %s34 = int_to_ptr.vmem [resolvable:$true] %s33
      %39 = dma.hbm_to_vmem [thread:$0]  %s2, 1280, %s34, [#allocation7], 128, 128, 8
    $region13: #{tpu_custom_call.1} parent=1 // pred_fallthru
      _
    // Predicated region
    $region14: #{tpu_custom_call.1} parent=1 // pred_check
      _
    $region15: #{tpu_custom_call.1} parent=1 // pred_check_branch
      %41 = sbr.rel (0) target = $region17
    $region16: #{tpu_custom_call.1} parent=1 // pred_region
      _
    $region17: #{tpu_custom_call.1} parent=1 // pred_fallthru
      _
    // Predicated region
    $region18: #{tpu_custom_call.1} parent=1 // pred_check
      _
    $region19: #{tpu_custom_call.1} parent=1 // pred_check_branch
      %43 = sbr.rel (0) target = $region21
    $region20: #{tpu_custom_call.1} parent=1 // pred_region
      %44 = dma.done [#allocation4], 256
    $region21: #{tpu_custom_call.1} parent=1 // pred_fallthru
      _
    // Predicated region
    $region22: #{tpu_custom_call.1} parent=1 // pred_check
      _
    $region23: #{tpu_custom_call.1} parent=1 // pred_check_branch
      %46 = sbr.rel (0) target = $region25
    $region24: #{tpu_custom_call.1} parent=1 // pred_region
      %47 = dma.done [#allocation7], 1280
    $region25: #{tpu_custom_call.1} parent=1 // pred_fallthru
      _
    %v48 = vld [vmem:[#allocation6] sm:$0xff]
    %v49 = vld [vmem:[#allocation6 + $0x8] sm:$0xff]
    %v50 = vld [vmem:[#allocation6 + $0x10] sm:$0xff]
    %v51 = vld [vmem:[#allocation6 + $0x18] sm:$0xff]
    %v52 = vld [vmem:[#allocation6 + $0x20] sm:$0xff]
    %v53 = vld [vmem:[#allocation6 + $0x28] sm:$0xff]
    %v54 = vld [vmem:[#allocation6 + $0x30] sm:$0xff]
    %v55 = vld [vmem:[#allocation6 + $0x38] sm:$0xff]
    %v56 = vld [vmem:[#allocation6 + $0x40] sm:$0xff]
    %v57 = vld [vmem:[#allocation6 + $0x48] sm:$0xff]
    %v58 = vld [vmem:[%s3] sm:$0x1]
    %v59 = vld [vmem:[%s3 + $0x1] sm:$0x1]
    %v60 = vlaneseq
    %v61 = vshrl.u32 %v60, 7
    %v62 = vsub.s32 0, %v61
    %v63 = vrot.slane %v59, %v62
    %v64 = vld [vmem:[%s3 + $0x2] sm:$0x1]
    %v65 = vld [vmem:[#allocation3] sm:$0xff]
    %v66 = vld [vmem:[#allocation3 + $0x8] sm:$0xff]
    %v67 = vlaneseq
    %v68 = vshrl.u32 %v67, 7
    %v69 = vsub.s32 0, %v68
    %v70 = vrot.slane %v58, %v69
    %vm71 = vcmask 130048
    %v73 = vsel %vm71, %v65, 0
    %v76 = vsel %vm71, %v66, 0
    %78 = vmatprep.subr.mxu0 0.0
    %79 = vmatpush1.msra.mxu0 %v48
    %80 = vmatprep.subr.mxu0 0.0
    %81 = vmatpush1.msra.mxu0 %v49
    %82 = vmatprep.subr.mxu0 0.0
    %83 = vmatpush1.msra.mxu0 0.0
    %84 = vmatprep.subr.mxu0 0.0
    %85 = vmatpush1.msra.mxu0 0.0
    %86 = vmatprep.subr.mxu0 0.0
    %87 = vmatpush1.msra.mxu0 0.0
    %88 = vmatprep.subr.mxu0 0.0
    %89 = vmatpush1.msra.mxu0 0.0
    %90 = vmatprep.subr.mxu0 0.0
    %91 = vmatpush1.msra.mxu0 0.0
    %92 = vmatprep.subr.mxu0 0.0
    %93 = vmatpush1.msra.mxu0 0.0
    %94 = vmatprep.subr.mxu0 0.0
    %95 = vmatpush1.msra.mxu0 0.0
    %96 = vmatprep.subr.mxu0 0.0
    %97 = vmatpush1.msra.mxu0 0.0
    %98 = vmatprep.subr.mxu0 0.0
    %99 = vmatpush1.msra.mxu0 0.0
    %100 = vmatprep.subr.mxu0 0.0
    %101 = vmatpush1.msra.mxu0 0.0
    %102 = vmatprep.subr.mxu0 0.0
    %103 = vmatpush1.msra.mxu0 0.0
    %104 = vmatprep.subr.mxu0 0.0
    %105 = vmatpush1.msra.mxu0 0.0
    %106 = vmatprep.subr.mxu0 0.0
    %107 = vmatpush1.msra.mxu0 0.0
    %108 = vmatprep.subr.mxu0 0.0
    %109 = vmatpush1.msra.mxu0 0.0
    %110 = vmatprep.subr.mxu0 0.0
    %111 = vmatpush1.msra.mxu0 0.0
    %112 = vmatprep.subr.mxu0 0.0
    %113 = vmatpush1.msra.mxu0 0.0
    %114 = vmatprep.subr.mxu0 0.0
    %115 = vmatpush1.msra.mxu0 0.0
    %116 = vmatprep.subr.mxu0 0.0
    %117 = vmatpush1.msra.mxu0 0.0
    %118 = vmatprep.subr.mxu0 0.0
    %119 = vmatpush1.msra.mxu0 0.0
    %120 = vmatprep.subr.mxu0 0.0
    %121 = vmatpush1.msra.mxu0 0.0
    %122 = vmatprep.subr.mxu0 0.0
    %123 = vmatpush1.msra.mxu0 0.0
    %124 = vmatprep.subr.mxu0 0.0
    %125 = vmatpush1.msra.mxu0 0.0
    %126 = vmatprep.subr.mxu0 0.0
    %127 = vmatpush1.msra.mxu0 0.0
    %128 = vmatprep.subr.mxu0 0.0
    %129 = vmatpush1.msra.mxu0 0.0
    %130 = vmatprep.subr.mxu0 0.0
    %131 = vmatpush1.msra.mxu0 0.0
    %132 = vmatprep.subr.mxu0 0.0
    %133 = vmatpush1.msra.mxu0 0.0
    %134 = vmatprep.subr.mxu0 0.0
    %135 = vmatpush1.msra.mxu0 0.0
    %136 = vmatprep.subr.mxu0 0.0
    %137 = vmatpush1.msra.mxu0 0.0
    %138 = vmatprep.subr.mxu0 0.0
    %139 = vmatpush1.msra.mxu0 0.0
    %140 = vmatprep.subr.mxu0 0.0
    %141 = vmatpush1.msra.mxu0 0.0
    %142 = vmatprep.mubr.f32.mxu0 0.0
    %143 = vmatmul.mubr.f32.gmra.mrb[0].mxu0 %v73
    %v144 = vpop.f32.mrb[0].mxu0
    %v145 = vadd.f32 %v70, %v144
    %v146 = vpop.f32.mrb[0].mxu0
    %147 = vmatprep.mubr.f32.mxu0 0.0
    %148 = vmatmul.mubr.f32.gmra.mrb[0].mxu0 %v76
    %v149 = vpop.f32.mrb[0].mxu0
    %v150 = vadd.f32 %v70, %v149
    %v151 = vpop.f32.mrb[0].mxu0
    %152 = vdwg.mxu0
    %v153 = vld [vmem:[%s1] sm:$0x3]
    %vm154 = vcmask 261120
    %v156 = vsel %vm154, %v153, 0
    %158 = vmatprep.subr.mxu0 0.0
    %159 = vmatpush1.msra.mxu0 %v50
    %160 = vmatprep.subr.mxu0 0.0
    %161 = vmatpush1.msra.mxu0 %v51
    %162 = vmatprep.subr.mxu0 0.0
    %163 = vmatpush1.msra.mxu0 %v52
    %164 = vmatprep.subr.mxu0 0.0
    %165 = vmatpush1.msra.mxu0 %v53
    %166 = vmatprep.subr.mxu0 0.0
    %167 = vmatpush1.msra.mxu0 0.0
    %168 = vmatprep.subr.mxu0 0.0
    %169 = vmatpush1.msra.mxu0 0.0
    %170 = vmatprep.subr.mxu0 0.0
    %171 = vmatpush1.msra.mxu0 0.0
    %172 = vmatprep.subr.mxu0 0.0
    %173 = vmatpush1.msra.mxu0 0.0
    %174 = vmatprep.subr.mxu0 0.0
    %175 = vmatpush1.msra.mxu0 0.0
    %176 = vmatprep.subr.mxu0 0.0
    %177 = vmatpush1.msra.mxu0 0.0
    %178 = vmatprep.subr.mxu0 0.0
    %179 = vmatpush1.msra.mxu0 0.0
    %180 = vmatprep.subr.mxu0 0.0
    %181 = vmatpush1.msra.mxu0 0.0
    %182 = vmatprep.subr.mxu0 0.0
    %183 = vmatpush1.msra.mxu0 0.0
    %184 = vmatprep.subr.mxu0 0.0
    %185 = vmatpush1.msra.mxu0 0.0
    %186 = vmatprep.subr.mxu0 0.0
    %187 = vmatpush1.msra.mxu0 0.0
    %188 = vmatprep.subr.mxu0 0.0
    %189 = vmatpush1.msra.mxu0 0.0
    %190 = vmatprep.subr.mxu0 0.0
    %191 = vmatpush1.msra.mxu0 0.0
    %192 = vmatprep.subr.mxu0 0.0
    %193 = vmatpush1.msra.mxu0 0.0
    %194 = vmatprep.subr.mxu0 0.0
    %195 = vmatpush1.msra.mxu0 0.0
    %196 = vmatprep.subr.mxu0 0.0
    %197 = vmatpush1.msra.mxu0 0.0
    %198 = vmatprep.subr.mxu0 0.0
    %199 = vmatpush1.msra.mxu0 0.0
    %200 = vmatprep.subr.mxu0 0.0
    %201 = vmatpush1.msra.mxu0 0.0
    %202 = vmatprep.subr.mxu0 0.0
    %203 = vmatpush1.msra.mxu0 0.0
    %204 = vmatprep.subr.mxu0 0.0
    %205 = vmatpush1.msra.mxu0 0.0
    %206 = vmatprep.subr.mxu0 0.0
    %207 = vmatpush1.msra.mxu0 0.0
    %208 = vmatprep.subr.mxu0 0.0
    %209 = vmatpush1.msra.mxu0 0.0
    %210 = vmatprep.subr.mxu0 0.0
    %211 = vmatpush1.msra.mxu0 0.0
    %212 = vmatprep.subr.mxu0 0.0
    %213 = vmatpush1.msra.mxu0 0.0
    %214 = vmatprep.subr.mxu0 0.0
    %215 = vmatpush1.msra.mxu0 0.0
    %216 = vmatprep.subr.mxu0 0.0
    %217 = vmatpush1.msra.mxu0 0.0
    %218 = vmatprep.subr.mxu0 0.0
    %219 = vmatpush1.msra.mxu0 0.0
    %220 = vmatprep.subr.mxu0 0.0
    %221 = vmatpush1.msra.mxu0 0.0
    %222 = vmatprep.mubr.f32.mxu0 0.0
    %223 = vmatmul.mubr.f32.gmra.mrb[0].mxu0 %v156
    %v224 = vpop.f32.mrb[0].mxu0
    %v225 = vadd.f32 0.0, %v224
    %v226 = vpop.f32.mrb[0].mxu0
    %227 = vdwg.mxu0
    %v228 = vadd.f32 %v145, %v225
    %v229 = vxor.u32 %v228, 2147483648
    %v230 = vmul.f32 %v229, 1.442695
    %v231 = vpow.pop %v230
    %v232 = vadd.f32 %v231, 1.0
    %v233 = vrcp.pop %v232
    %v234 = vmul.f32 1.0, %v233
    %236 = vrot.lane.b32.xlu0 %v63, 64
    %v237 = vpop.permute.xlu0 %236
    %v239 = vadd.f32 %v225, %v237
    %241 = vrot.lane.b32.xlu0 %v239, 64
    %v242 = vpop.permute.xlu0 %241
    %v244 = vmul.f32 %v234, %v242
    %246 = vrot.lane.b32.xlu0 %v244, 64
    %v247 = vpop.permute.xlu0 %246
    %v249 = vadd.f32 %v145, %v247
    %v250 = vtanh.pop %v249
    %v251 = vsub.f32 1.0, %v234
    %253 = vrot.lane.b32.xlu0 %v250, 96
    %v254 = vpop.permute.xlu0 %253
    %v256 = vmul.f32 %v251, %v254
    %257 = vrot.lane.b32.xlu0 %v153, 32
    %v258 = vpop.permute.xlu0 %257
    %v260 = vmul.f32 %v234, %v258
    %v261 = vadd.f32 %v256, %v260
    %263 = vrot.lane.b32.xlu0 %v261, 96
    %v264 = vpop.permute.xlu0 %263
    %vm266 = vcmask 254976
    %267 = vst.msk [vmem:[#allocation2] sm:$0x3] %vm266, %v264
    %v268 = vsel %vm154, %v264, 0
    %270 = vmatprep.subr.mxu0 0.0
    %271 = vmatpush1.msra.mxu0 %v50
    %272 = vmatprep.subr.mxu0 0.0
    %273 = vmatpush1.msra.mxu0 %v51
    %274 = vmatprep.subr.mxu0 0.0
    %275 = vmatpush1.msra.mxu0 %v52
    %276 = vmatprep.subr.mxu0 0.0
    %277 = vmatpush1.msra.mxu0 %v53
    %278 = vmatprep.subr.mxu0 0.0
    %279 = vmatpush1.msra.mxu0 0.0
    %280 = vmatprep.subr.mxu0 0.0
    %281 = vmatpush1.msra.mxu0 0.0
    %282 = vmatprep.subr.mxu0 0.0
    %283 = vmatpush1.msra.mxu0 0.0
    %284 = vmatprep.subr.mxu0 0.0
    %285 = vmatpush1.msra.mxu0 0.0
    %286 = vmatprep.subr.mxu0 0.0
    %287 = vmatpush1.msra.mxu0 0.0
    %288 = vmatprep.subr.mxu0 0.0
    %289 = vmatpush1.msra.mxu0 0.0
    %290 = vmatprep.subr.mxu0 0.0
    %291 = vmatpush1.msra.mxu0 0.0
    %292 = vmatprep.subr.mxu0 0.0
    %293 = vmatpush1.msra.mxu0 0.0
    %294 = vmatprep.subr.mxu0 0.0
    %295 = vmatpush1.msra.mxu0 0.0
    %296 = vmatprep.subr.mxu0 0.0
    %297 = vmatpush1.msra.mxu0 0.0
    %298 = vmatprep.subr.mxu0 0.0
    %299 = vmatpush1.msra.mxu0 0.0
    %300 = vmatprep.subr.mxu0 0.0
    %301 = vmatpush1.msra.mxu0 0.0
    %302 = vmatprep.subr.mxu0 0.0
    %303 = vmatpush1.msra.mxu0 0.0
    %304 = vmatprep.subr.mxu0 0.0
    %305 = vmatpush1.msra.mxu0 0.0
    %306 = vmatprep.subr.mxu0 0.0
    %307 = vmatpush1.msra.mxu0 0.0
    %308 = vmatprep.subr.mxu0 0.0
    %309 = vmatpush1.msra.mxu0 0.0
    %310 = vmatprep.subr.mxu0 0.0
    %311 = vmatpush1.msra.mxu0 0.0
    %312 = vmatprep.subr.mxu0 0.0
    %313 = vmatpush1.msra.mxu0 0.0
    %314 = vmatprep.subr.mxu0 0.0
    %315 = vmatpush1.msra.mxu0 0.0
    %316 = vmatprep.subr.mxu0 0.0
    %317 = vmatpush1.msra.mxu0 0.0
    %318 = vmatprep.subr.mxu0 0.0
    %319 = vmatpush1.msra.mxu0 0.0
    %320 = vmatprep.subr.mxu0 0.0
    %321 = vmatpush1.msra.mxu0 0.0
    %322 = vmatprep.subr.mxu0 0.0
    %323 = vmatpush1.msra.mxu0 0.0
    %324 = vmatprep.subr.mxu0 0.0
    %325 = vmatpush1.msra.mxu0 0.0
    %326 = vmatprep.subr.mxu0 0.0
    %327 = vmatpush1.msra.mxu0 0.0
    %328 = vmatprep.subr.mxu0 0.0
    %329 = vmatpush1.msra.mxu0 0.0
    %330 = vmatprep.subr.mxu0 0.0
    %331 = vmatpush1.msra.mxu0 0.0
    %332 = vmatprep.subr.mxu0 0.0
    %333 = vmatpush1.msra.mxu0 0.0
    %334 = vmatprep.mubr.f32.mxu0 0.0
    %335 = vmatmul.mubr.f32.gmra.mrb[0].mxu0 %v268
    %v336 = vpop.f32.mrb[0].mxu0
    %v337 = vadd.f32 0.0, %v336
    %v338 = vpop.f32.mrb[0].mxu0
    %339 = vdwg.mxu0
    %v341 = vrot.slane %v337, 6
    %v343 = vadd.f32 %v145, %v341
    %v344 = vxor.u32 %v343, 2147483648
    %v345 = vmul.f32 %v344, 1.442695
    %v346 = vpow.pop %v345
    %v347 = vadd.f32 %v346, 1.0
    %v348 = vrcp.pop %v347
    %v349 = vmul.f32 1.0, %v348
    %v350 = vadd.f32 %v337, %v237
    %v352 = vrot.slane %v350, 6
    %353 = vrot.lane.b32.xlu0 %v352, 64
    %v354 = vpop.permute.xlu0 %353
    %v356 = vmul.f32 %v349, %v354
    %358 = vrot.lane.b32.xlu0 %v356, 64
    %v359 = vpop.permute.xlu0 %358
    %v361 = vadd.f32 %v145, %v359
    %v362 = vtanh.pop %v361
    %v363 = vsub.f32 1.0, %v349
    %365 = vrot.lane.b32.xlu0 %v362, 96
    %v366 = vpop.permute.xlu0 %365
    %v368 = vmul.f32 %v363, %v366
    %v369 = vrot.slane %v261, 6
    %v371 = vmul.f32 %v349, %v369
    %v372 = vadd.f32 %v368, %v371
    %374 = vrot.lane.b32.xlu0 %v372, 96
    %v375 = vpop.permute.xlu0 %374
    %vm377 = vcmask 257026
    %378 = vst.msk [vmem:[#allocation2] sm:$0xc] %vm377, %v375
    %v379 = vrot.slane %v372, 2
    %380 = vrot.lane.b32.xlu0 %v379, 96
    %v381 = vpop.permute.xlu0 %380
    %v382 = vsel %vm154, %v381, 0
    %384 = vmatprep.subr.mxu0 0.0
    %385 = vmatpush1.msra.mxu0 %v50
    %386 = vmatprep.subr.mxu0 0.0
    %387 = vmatpush1.msra.mxu0 %v51
    %388 = vmatprep.subr.mxu0 0.0
    %389 = vmatpush1.msra.mxu0 %v52
    %390 = vmatprep.subr.mxu0 0.0
    %391 = vmatpush1.msra.mxu0 %v53
    %392 = vmatprep.subr.mxu0 0.0
    %393 = vmatpush1.msra.mxu0 0.0
    %394 = vmatprep.subr.mxu0 0.0
    %395 = vmatpush1.msra.mxu0 0.0
    %396 = vmatprep.subr.mxu0 0.0
    %397 = vmatpush1.msra.mxu0 0.0
    %398 = vmatprep.subr.mxu0 0.0
    %399 = vmatpush1.msra.mxu0 0.0
    %400 = vmatprep.subr.mxu0 0.0
    %401 = vmatpush1.msra.mxu0 0.0
    %402 = vmatprep.subr.mxu0 0.0
    %403 = vmatpush1.msra.mxu0 0.0
    %404 = vmatprep.subr.mxu0 0.0
    %405 = vmatpush1.msra.mxu0 0.0
    %406 = vmatprep.subr.mxu0 0.0
    %407 = vmatpush1.msra.mxu0 0.0
    %408 = vmatprep.subr.mxu0 0.0
    %409 = vmatpush1.msra.mxu0 0.0
    %410 = vmatprep.subr.mxu0 0.0
    %411 = vmatpush1.msra.mxu0 0.0
    %412 = vmatprep.subr.mxu0 0.0
    %413 = vmatpush1.msra.mxu0 0.0
    %414 = vmatprep.subr.mxu0 0.0
    %415 = vmatpush1.msra.mxu0 0.0
    %416 = vmatprep.subr.mxu0 0.0
    %417 = vmatpush1.msra.mxu0 0.0
    %418 = vmatprep.subr.mxu0 0.0
    %419 = vmatpush1.msra.mxu0 0.0
    %420 = vmatprep.subr.mxu0 0.0
    %421 = vmatpush1.msra.mxu0 0.0
    %422 = vmatprep.subr.mxu0 0.0
    %423 = vmatpush1.msra.mxu0 0.0
    %424 = vmatprep.subr.mxu0 0.0
    %425 = vmatpush1.msra.mxu0 0.0
    %426 = vmatprep.subr.mxu0 0.0
    %427 = vmatpush1.msra.mxu0 0.0
    %428 = vmatprep.subr.mxu0 0.0
    %429 = vmatpush1.msra.mxu0 0.0
    %430 = vmatprep.subr.mxu0 0.0
    %431 = vmatpush1.msra.mxu0 0.0
    %432 = vmatprep.subr.mxu0 0.0
    %433 = vmatpush1.msra.mxu0 0.0
    %434 = vmatprep.subr.mxu0 0.0
    %435 = vmatpush1.msra.mxu0 0.0
    %436 = vmatprep.subr.mxu0 0.0
    %437 = vmatpush1.msra.mxu0 0.0
    %438 = vmatprep.subr.mxu0 0.0
    %439 = vmatpush1.msra.mxu0 0.0
    %440 = vmatprep.subr.mxu0 0.0
    %441 = vmatpush1.msra.mxu0 0.0
    %442 = vmatprep.subr.mxu0 0.0
    %443 = vmatpush1.msra.mxu0 0.0
    %444 = vmatprep.subr.mxu0 0.0
    %445 = vmatpush1.msra.mxu0 0.0
    %446 = vmatprep.subr.mxu0 0.0
    %447 = vmatpush1.msra.mxu0 0.0
    %448 = vmatprep.mubr.f32.mxu0 0.0
    %449 = vmatmul.mubr.f32.gmra.mrb[0].mxu0 %v382
    %v450 = vpop.f32.mrb[0].mxu0
    %v451 = vadd.f32 0.0, %v450
    %v452 = vpop.f32.mrb[0].mxu0
    %453 = vdwg.mxu0
    %v455 = vrot.slane %v451, 4
    %v457 = vadd.f32 %v145, %v455
    %v458 = vxor.u32 %v457, 2147483648
    %v459 = vmul.f32 %v458, 1.442695
    %v460 = vpow.pop %v459
    %v461 = vadd.f32 %v460, 1.0
    %v462 = vrcp.pop %v461
    %v463 = vmul.f32 1.0, %v462
    %v464 = vadd.f32 %v451, %v237
    %v466 = vrot.slane %v464, 4
    %467 = vrot.lane.b32.xlu0 %v466, 64
    %v468 = vpop.permute.xlu0 %467
    %v470 = vmul.f32 %v463, %v468
    %472 = vrot.lane.b32.xlu0 %v470, 64
    %v473 = vpop.permute.xlu0 %472
    %v475 = vadd.f32 %v145, %v473
    %v476 = vtanh.pop %v475
    %v477 = vsub.f32 1.0, %v463
    %479 = vrot.lane.b32.xlu0 %v476, 96
    %v480 = vpop.permute.xlu0 %479
    %v482 = vmul.f32 %v477, %v480
    %v483 = vrot.slane %v372, 6
    %v485 = vmul.f32 %v463, %v483
    %v486 = vadd.f32 %v482, %v485
    %488 = vrot.lane.b32.xlu0 %v486, 96
    %v489 = vpop.permute.xlu0 %488
    %vm491 = vcmask 259076
    %492 = vst.msk [vmem:[#allocation2] sm:$0x30] %vm491, %v489
    %v493 = vrot.slane %v486, 4
    %494 = vrot.lane.b32.xlu0 %v493, 96
    %v495 = vpop.permute.xlu0 %494
    %v496 = vsel %vm154, %v495, 0
    %498 = vmatprep.subr.mxu0 0.0
    %499 = vmatpush1.msra.mxu0 %v50
    %500 = vmatprep.subr.mxu0 0.0
    %501 = vmatpush1.msra.mxu0 %v51
    %502 = vmatprep.subr.mxu0 0.0
    %503 = vmatpush1.msra.mxu0 %v52
    %504 = vmatprep.subr.mxu0 0.0
    %505 = vmatpush1.msra.mxu0 %v53
    %506 = vmatprep.subr.mxu0 0.0
    %507 = vmatpush1.msra.mxu0 0.0
    %508 = vmatprep.subr.mxu0 0.0
    %509 = vmatpush1.msra.mxu0 0.0
    %510 = vmatprep.subr.mxu0 0.0
    %511 = vmatpush1.msra.mxu0 0.0
    %512 = vmatprep.subr.mxu0 0.0
    %513 = vmatpush1.msra.mxu0 0.0
    %514 = vmatprep.subr.mxu0 0.0
    %515 = vmatpush1.msra.mxu0 0.0
    %516 = vmatprep.subr.mxu0 0.0
    %517 = vmatpush1.msra.mxu0 0.0
    %518 = vmatprep.subr.mxu0 0.0
    %519 = vmatpush1.msra.mxu0 0.0
    %520 = vmatprep.subr.mxu0 0.0
    %521 = vmatpush1.msra.mxu0 0.0
    %522 = vmatprep.subr.mxu0 0.0
    %523 = vmatpush1.msra.mxu0 0.0
    %524 = vmatprep.subr.mxu0 0.0
    %525 = vmatpush1.msra.mxu0 0.0
    %526 = vmatprep.subr.mxu0 0.0
    %527 = vmatpush1.msra.mxu0 0.0
    %528 = vmatprep.subr.mxu0 0.0
    %529 = vmatpush1.msra.mxu0 0.0
    %530 = vmatprep.subr.mxu0 0.0
    %531 = vmatpush1.msra.mxu0 0.0
    %532 = vmatprep.subr.mxu0 0.0
    %533 = vmatpush1.msra.mxu0 0.0
    %534 = vmatprep.subr.mxu0 0.0
    %535 = vmatpush1.msra.mxu0 0.0
    %536 = vmatprep.subr.mxu0 0.0
    %537 = vmatpush1.msra.mxu0 0.0
    %538 = vmatprep.subr.mxu0 0.0
    %539 = vmatpush1.msra.mxu0 0.0
    %540 = vmatprep.subr.mxu0 0.0
    %541 = vmatpush1.msra.mxu0 0.0
    %542 = vmatprep.subr.mxu0 0.0
    %543 = vmatpush1.msra.mxu0 0.0
    %544 = vmatprep.subr.mxu0 0.0
    %545 = vmatpush1.msra.mxu0 0.0
    %546 = vmatprep.subr.mxu0 0.0
    %547 = vmatpush1.msra.mxu0 0.0
    %548 = vmatprep.subr.mxu0 0.0
    %549 = vmatpush1.msra.mxu0 0.0
    %550 = vmatprep.subr.mxu0 0.0
    %551 = vmatpush1.msra.mxu0 0.0
    %552 = vmatprep.subr.mxu0 0.0
    %553 = vmatpush1.msra.mxu0 0.0
    %554 = vmatprep.subr.mxu0 0.0
    %555 = vmatpush1.msra.mxu0 0.0
    %556 = vmatprep.subr.mxu0 0.0
    %557 = vmatpush1.msra.mxu0 0.0
    %558 = vmatprep.subr.mxu0 0.0
    %559 = vmatpush1.msra.mxu0 0.0
    %560 = vmatprep.subr.mxu0 0.0
    %561 = vmatpush1.msra.mxu0 0.0
    %562 = vmatprep.mubr.f32.mxu0 0.0
    %563 = vmatmul.mubr.f32.gmra.mrb[0].mxu0 %v496
    %v564 = vpop.f32.mrb[0].mxu0
    %v565 = vadd.f32 0.0, %v564
    %v566 = vpop.f32.mrb[0].mxu0
    %567 = vdwg.mxu0
    %v569 = vrot.slane %v565, 2
    %v571 = vadd.f32 %v145, %v569
    %v572 = vxor.u32 %v571, 2147483648
    %v573 = vmul.f32 %v572, 1.442695
    %v574 = vpow.pop %v573
    %v575 = vadd.f32 %v574, 1.0
    %v576 = vrcp.pop %v575
    %v577 = vmul.f32 1.0, %v576
    %v578 = vadd.f32 %v565, %v237
    %v580 = vrot.slane %v578, 2
    %581 = vrot.lane.b32.xlu0 %v580, 64
    %v582 = vpop.permute.xlu0 %581
    %v584 = vmul.f32 %v577, %v582
    %586 = vrot.lane.b32.xlu0 %v584, 64
    %v587 = vpop.permute.xlu0 %586
    %v589 = vadd.f32 %v145, %v587
    %v590 = vtanh.pop %v589
    %v591 = vsub.f32 1.0, %v577
    %593 = vrot.lane.b32.xlu0 %v590, 96
    %v594 = vpop.permute.xlu0 %593
    %v596 = vmul.f32 %v591, %v594
    %v597 = vrot.slane %v486, 6
    %v599 = vmul.f32 %v577, %v597
    %v600 = vadd.f32 %v596, %v599
    %602 = vrot.lane.b32.xlu0 %v600, 96
    %v603 = vpop.permute.xlu0 %602
    %vm605 = vcmask 261126
    %606 = vst.msk [vmem:[#allocation2] sm:$0xc0] %vm605, %v603
    %v607 = vrot.slane %v600, 6
    %608 = vrot.lane.b32.xlu0 %v607, 96
    %v609 = vpop.permute.xlu0 %608
    %v610 = vsel %vm154, %v609, 0
    %612 = vmatprep.subr.mxu0 0.0
    %613 = vmatpush1.msra.mxu0 %v50
    %614 = vmatprep.subr.mxu0 0.0
    %615 = vmatpush1.msra.mxu0 %v51
    %616 = vmatprep.subr.mxu0 0.0
    %617 = vmatpush1.msra.mxu0 %v52
    %618 = vmatprep.subr.mxu0 0.0
    %619 = vmatpush1.msra.mxu0 %v53
    %620 = vmatprep.subr.mxu0 0.0
    %621 = vmatpush1.msra.mxu0 0.0
    %622 = vmatprep.subr.mxu0 0.0
    %623 = vmatpush1.msra.mxu0 0.0
    %624 = vmatprep.subr.mxu0 0.0
    %625 = vmatpush1.msra.mxu0 0.0
    %626 = vmatprep.subr.mxu0 0.0
    %627 = vmatpush1.msra.mxu0 0.0
    %628 = vmatprep.subr.mxu0 0.0
    %629 = vmatpush1.msra.mxu0 0.0
    %630 = vmatprep.subr.mxu0 0.0
    %631 = vmatpush1.msra.mxu0 0.0
    %632 = vmatprep.subr.mxu0 0.0
    %633 = vmatpush1.msra.mxu0 0.0
    %634 = vmatprep.subr.mxu0 0.0
    %635 = vmatpush1.msra.mxu0 0.0
    %636 = vmatprep.subr.mxu0 0.0
    %637 = vmatpush1.msra.mxu0 0.0
    %638 = vmatprep.subr.mxu0 0.0
    %639 = vmatpush1.msra.mxu0 0.0
    %640 = vmatprep.subr.mxu0 0.0
    %641 = vmatpush1.msra.mxu0 0.0
    %642 = vmatprep.subr.mxu0 0.0
    %643 = vmatpush1.msra.mxu0 0.0
    %644 = vmatprep.subr.mxu0 0.0
    %645 = vmatpush1.msra.mxu0 0.0
    %646 = vmatprep.subr.mxu0 0.0
    %647 = vmatpush1.msra.mxu0 0.0
    %648 = vmatprep.subr.mxu0 0.0
    %649 = vmatpush1.msra.mxu0 0.0
    %650 = vmatprep.subr.mxu0 0.0
    %651 = vmatpush1.msra.mxu0 0.0
    %652 = vmatprep.subr.mxu0 0.0
    %653 = vmatpush1.msra.mxu0 0.0
    %654 = vmatprep.subr.mxu0 0.0
    %655 = vmatpush1.msra.mxu0 0.0
    %656 = vmatprep.subr.mxu0 0.0
    %657 = vmatpush1.msra.mxu0 0.0
    %658 = vmatprep.subr.mxu0 0.0
    %659 = vmatpush1.msra.mxu0 0.0
    %660 = vmatprep.subr.mxu0 0.0
    %661 = vmatpush1.msra.mxu0 0.0
    %662 = vmatprep.subr.mxu0 0.0
    %663 = vmatpush1.msra.mxu0 0.0
    %664 = vmatprep.subr.mxu0 0.0
    %665 = vmatpush1.msra.mxu0 0.0
    %666 = vmatprep.subr.mxu0 0.0
    %667 = vmatpush1.msra.mxu0 0.0
    %668 = vmatprep.subr.mxu0 0.0
    %669 = vmatpush1.msra.mxu0 0.0
    %670 = vmatprep.subr.mxu0 0.0
    %671 = vmatpush1.msra.mxu0 0.0
    %672 = vmatprep.subr.mxu0 0.0
    %673 = vmatpush1.msra.mxu0 0.0
    %674 = vmatprep.subr.mxu0 0.0
    %675 = vmatpush1.msra.mxu0 0.0
    %676 = vmatprep.mubr.f32.mxu0 0.0
    %677 = vmatmul.mubr.f32.gmra.mrb[0].mxu0 %v610
    %v678 = vpop.f32.mrb[0].mxu0
    %v679 = vadd.f32 0.0, %v678
    %v680 = vpop.f32.mrb[0].mxu0
    %681 = vdwg.mxu0
    %v682 = vadd.f32 %v150, %v679
    %v683 = vxor.u32 %v682, 2147483648
    %v684 = vmul.f32 %v683, 1.442695
    %v685 = vpow.pop %v684
    %v686 = vadd.f32 %v685, 1.0
    %v687 = vrcp.pop %v686
    %v688 = vmul.f32 1.0, %v687
    %v689 = vadd.f32 %v679, %v237
    %691 = vrot.lane.b32.xlu0 %v689, 64
    %v692 = vpop.permute.xlu0 %691
    %v694 = vmul.f32 %v688, %v692
    %696 = vrot.lane.b32.xlu0 %v694, 64
    %v697 = vpop.permute.xlu0 %696
    %v699 = vadd.f32 %v150, %v697
    %v700 = vtanh.pop %v699
    %v701 = vsub.f32 1.0, %v688
    %703 = vrot.lane.b32.xlu0 %v700, 96
    %v704 = vpop.permute.xlu0 %703
    %v706 = vmul.f32 %v701, %v704
    %v708 = vmul.f32 %v688, %v607
    %v709 = vadd.f32 %v706, %v708
    %711 = vrot.lane.b32.xlu0 %v709, 96
    %v712 = vpop.permute.xlu0 %711
    %714 = vst.msk [vmem:[#allocation2 + $0x8] sm:$0x3] %vm266, %v712
    %v715 = vsel %vm154, %v712, 0
    %717 = vmatprep.subr.mxu0 0.0
    %718 = vmatpush1.msra.mxu0 %v50
    %719 = vmatprep.subr.mxu0 0.0
    %720 = vmatpush1.msra.mxu0 %v51
    %721 = vmatprep.subr.mxu0 0.0
    %722 = vmatpush1.msra.mxu0 %v52
    %723 = vmatprep.subr.mxu0 0.0
    %724 = vmatpush1.msra.mxu0 %v53
    %725 = vmatprep.subr.mxu0 0.0
    %726 = vmatpush1.msra.mxu0 0.0
    %727 = vmatprep.subr.mxu0 0.0
    %728 = vmatpush1.msra.mxu0 0.0
    %729 = vmatprep.subr.mxu0 0.0
    %730 = vmatpush1.msra.mxu0 0.0
    %731 = vmatprep.subr.mxu0 0.0
    %732 = vmatpush1.msra.mxu0 0.0
    %733 = vmatprep.subr.mxu0 0.0
    %734 = vmatpush1.msra.mxu0 0.0
    %735 = vmatprep.subr.mxu0 0.0
    %736 = vmatpush1.msra.mxu0 0.0
    %737 = vmatprep.subr.mxu0 0.0
    %738 = vmatpush1.msra.mxu0 0.0
    %739 = vmatprep.subr.mxu0 0.0
    %740 = vmatpush1.msra.mxu0 0.0
    %741 = vmatprep.subr.mxu0 0.0
    %742 = vmatpush1.msra.mxu0 0.0
    %743 = vmatprep.subr.mxu0 0.0
    %744 = vmatpush1.msra.mxu0 0.0
    %745 = vmatprep.subr.mxu0 0.0
    %746 = vmatpush1.msra.mxu0 0.0
    %747 = vmatprep.subr.mxu0 0.0
    %748 = vmatpush1.msra.mxu0 0.0
    %749 = vmatprep.subr.mxu0 0.0
    %750 = vmatpush1.msra.mxu0 0.0
    %751 = vmatprep.subr.mxu0 0.0
    %752 = vmatpush1.msra.mxu0 0.0
    %753 = vmatprep.subr.mxu0 0.0
    %754 = vmatpush1.msra.mxu0 0.0
    %755 = vmatprep.subr.mxu0 0.0
    %756 = vmatpush1.msra.mxu0 0.0
    %757 = vmatprep.subr.mxu0 0.0
    %758 = vmatpush1.msra.mxu0 0.0
    %759 = vmatprep.subr.mxu0 0.0
    %760 = vmatpush1.msra.mxu0 0.0
    %761 = vmatprep.subr.mxu0 0.0
    %762 = vmatpush1.msra.mxu0 0.0
    %763 = vmatprep.subr.mxu0 0.0
    %764 = vmatpush1.msra.mxu0 0.0
    %765 = vmatprep.subr.mxu0 0.0
    %766 = vmatpush1.msra.mxu0 0.0
    %767 = vmatprep.subr.mxu0 0.0
    %768 = vmatpush1.msra.mxu0 0.0
    %769 = vmatprep.subr.mxu0 0.0
    %770 = vmatpush1.msra.mxu0 0.0
    %771 = vmatprep.subr.mxu0 0.0
    %772 = vmatpush1.msra.mxu0 0.0
    %773 = vmatprep.subr.mxu0 0.0
    %774 = vmatpush1.msra.mxu0 0.0
    %775 = vmatprep.subr.mxu0 0.0
    %776 = vmatpush1.msra.mxu0 0.0
    %777 = vmatprep.subr.mxu0 0.0
    %778 = vmatpush1.msra.mxu0 0.0
    %779 = vmatprep.subr.mxu0 0.0
    %780 = vmatpush1.msra.mxu0 0.0
    %781 = vmatprep.mubr.f32.mxu0 0.0
    %782 = vmatmul.mubr.f32.gmra.mrb[0].mxu0 %v715
    %v783 = vpop.f32.mrb[0].mxu0
    %v784 = vadd.f32 0.0, %v783
    %v785 = vpop.f32.mrb[0].mxu0
    %786 = vdwg.mxu0
    %v788 = vrot.slane %v784, 6
    %v790 = vadd.f32 %v150, %v788
    %v791 = vxor.u32 %v790, 2147483648
    %v792 = vmul.f32 %v791, 1.442695
    %v793 = vpow.pop %v792
    %v794 = vadd.f32 %v793, 1.0
    %v795 = vrcp.pop %v794
    %v796 = vmul.f32 1.0, %v795
    %v797 = vadd.f32 %v784, %v237
    %v799 = vrot.slane %v797, 6
    %800 = vrot.lane.b32.xlu0 %v799, 64
    %v801 = vpop.permute.xlu0 %800
    %v803 = vmul.f32 %v796, %v801
    %805 = vrot.lane.b32.xlu0 %v803, 64
    %v806 = vpop.permute.xlu0 %805
    %v808 = vadd.f32 %v150, %v806
    %v809 = vtanh.pop %v808
    %v810 = vsub.f32 1.0, %v796
    %812 = vrot.lane.b32.xlu0 %v809, 96
    %v813 = vpop.permute.xlu0 %812
    %v815 = vmul.f32 %v810, %v813
    %v816 = vrot.slane %v709, 6
    %v818 = vmul.f32 %v796, %v816
    %v819 = vadd.f32 %v815, %v818
    %821 = vrot.lane.b32.xlu0 %v819, 96
    %v822 = vpop.permute.xlu0 %821
    %824 = vst.msk [vmem:[#allocation2 + $0x8] sm:$0xc] %vm377, %v822
    %v825 = vrot.slane %v819, 2
    %826 = vrot.lane.b32.xlu0 %v825, 96
    %v827 = vpop.permute.xlu0 %826
    %v828 = vsel %vm154, %v827, 0
    %830 = vmatprep.subr.mxu0 0.0
    %831 = vmatpush1.msra.mxu0 %v50
    %832 = vmatprep.subr.mxu0 0.0
    %833 = vmatpush1.msra.mxu0 %v51
    %834 = vmatprep.subr.mxu0 0.0
    %835 = vmatpush1.msra.mxu0 %v52
    %836 = vmatprep.subr.mxu0 0.0
    %837 = vmatpush1.msra.mxu0 %v53
    %838 = vmatprep.subr.mxu0 0.0
    %839 = vmatpush1.msra.mxu0 0.0
    %840 = vmatprep.subr.mxu0 0.0
    %841 = vmatpush1.msra.mxu0 0.0
    %842 = vmatprep.subr.mxu0 0.0
    %843 = vmatpush1.msra.mxu0 0.0
    %844 = vmatprep.subr.mxu0 0.0
    %845 = vmatpush1.msra.mxu0 0.0
    %846 = vmatprep.subr.mxu0 0.0
    %847 = vmatpush1.msra.mxu0 0.0
    %848 = vmatprep.subr.mxu0 0.0
    %849 = vmatpush1.msra.mxu0 0.0
    %850 = vmatprep.subr.mxu0 0.0
    %851 = vmatpush1.msra.mxu0 0.0
    %852 = vmatprep.subr.mxu0 0.0
    %853 = vmatpush1.msra.mxu0 0.0
    %854 = vmatprep.subr.mxu0 0.0
    %855 = vmatpush1.msra.mxu0 0.0
    %856 = vmatprep.subr.mxu0 0.0
    %857 = vmatpush1.msra.mxu0 0.0
    %858 = vmatprep.subr.mxu0 0.0
    %859 = vmatpush1.msra.mxu0 0.0
    %860 = vmatprep.subr.mxu0 0.0
    %861 = vmatpush1.msra.mxu0 0.0
    %862 = vmatprep.subr.mxu0 0.0
    %863 = vmatpush1.msra.mxu0 0.0
    %864 = vmatprep.subr.mxu0 0.0
    %865 = vmatpush1.msra.mxu0 0.0
    %866 = vmatprep.subr.mxu0 0.0
    %867 = vmatpush1.msra.mxu0 0.0
    %868 = vmatprep.subr.mxu0 0.0
    %869 = vmatpush1.msra.mxu0 0.0
    %870 = vmatprep.subr.mxu0 0.0
    %871 = vmatpush1.msra.mxu0 0.0
    %872 = vmatprep.subr.mxu0 0.0
    %873 = vmatpush1.msra.mxu0 0.0
    %874 = vmatprep.subr.mxu0 0.0
    %875 = vmatpush1.msra.mxu0 0.0
    %876 = vmatprep.subr.mxu0 0.0
    %877 = vmatpush1.msra.mxu0 0.0
    %878 = vmatprep.subr.mxu0 0.0
    %879 = vmatpush1.msra.mxu0 0.0
    %880 = vmatprep.subr.mxu0 0.0
    %881 = vmatpush1.msra.mxu0 0.0
    %882 = vmatprep.subr.mxu0 0.0
    %883 = vmatpush1.msra.mxu0 0.0
    %884 = vmatprep.subr.mxu0 0.0
    %885 = vmatpush1.msra.mxu0 0.0
    %886 = vmatprep.subr.mxu0 0.0
    %887 = vmatpush1.msra.mxu0 0.0
    %888 = vmatprep.subr.mxu0 0.0
    %889 = vmatpush1.msra.mxu0 0.0
    %890 = vmatprep.subr.mxu0 0.0
    %891 = vmatpush1.msra.mxu0 0.0
    %892 = vmatprep.subr.mxu0 0.0
    %893 = vmatpush1.msra.mxu0 0.0
    %894 = vmatprep.mubr.f32.mxu0 0.0
    %895 = vmatmul.mubr.f32.gmra.mrb[0].mxu0 %v828
    %v896 = vpop.f32.mrb[0].mxu0
    %v897 = vadd.f32 0.0, %v896
    %v898 = vpop.f32.mrb[0].mxu0
    %899 = vdwg.mxu0
    %v901 = vrot.slane %v897, 4
    %v903 = vadd.f32 %v150, %v901
    %v904 = vxor.u32 %v903, 2147483648
    %v905 = vmul.f32 %v904, 1.442695
    %v906 = vpow.pop %v905
    %v907 = vadd.f32 %v906, 1.0
    %v908 = vrcp.pop %v907
    %v909 = vmul.f32 1.0, %v908
    %v910 = vadd.f32 %v897, %v237
    %v912 = vrot.slane %v910, 4
    %913 = vrot.lane.b32.xlu0 %v912, 64
    %v914 = vpop.permute.xlu0 %913
    %v916 = vmul.f32 %v909, %v914
    %918 = vrot.lane.b32.xlu0 %v916, 64
    %v919 = vpop.permute.xlu0 %918
    %v921 = vadd.f32 %v150, %v919
    %v922 = vtanh.pop %v921
    %v923 = vsub.f32 1.0, %v909
    %925 = vrot.lane.b32.xlu0 %v922, 96
    %v926 = vpop.permute.xlu0 %925
    %v928 = vmul.f32 %v923, %v926
    %v929 = vrot.slane %v819, 6
    %v931 = vmul.f32 %v909, %v929
    %v932 = vadd.f32 %v928, %v931
    %934 = vrot.lane.b32.xlu0 %v932, 96
    %v935 = vpop.permute.xlu0 %934
    %937 = vst.msk [vmem:[#allocation2 + $0x8] sm:$0x30] %vm491, %v935
    %v938 = vrot.slane %v932, 4
    %939 = vrot.lane.b32.xlu0 %v938, 96
    %v940 = vpop.permute.xlu0 %939
    %v941 = vsel %vm154, %v940, 0
    %943 = vmatprep.subr.mxu0 0.0
    %944 = vmatpush1.msra.mxu0 %v50
    %945 = vmatprep.subr.mxu0 0.0
    %946 = vmatpush1.msra.mxu0 %v51
    %947 = vmatprep.subr.mxu0 0.0
    %948 = vmatpush1.msra.mxu0 %v52
    %949 = vmatprep.subr.mxu0 0.0
    %950 = vmatpush1.msra.mxu0 %v53
    %951 = vmatprep.subr.mxu0 0.0
    %952 = vmatpush1.msra.mxu0 0.0
    %953 = vmatprep.subr.mxu0 0.0
    %954 = vmatpush1.msra.mxu0 0.0
    %955 = vmatprep.subr.mxu0 0.0
    %956 = vmatpush1.msra.mxu0 0.0
    %957 = vmatprep.subr.mxu0 0.0
    %958 = vmatpush1.msra.mxu0 0.0
    %959 = vmatprep.subr.mxu0 0.0
    %960 = vmatpush1.msra.mxu0 0.0
    %961 = vmatprep.subr.mxu0 0.0
    %962 = vmatpush1.msra.mxu0 0.0
    %963 = vmatprep.subr.mxu0 0.0
    %964 = vmatpush1.msra.mxu0 0.0
    %965 = vmatprep.subr.mxu0 0.0
    %966 = vmatpush1.msra.mxu0 0.0
    %967 = vmatprep.subr.mxu0 0.0
    %968 = vmatpush1.msra.mxu0 0.0
    %969 = vmatprep.subr.mxu0 0.0
    %970 = vmatpush1.msra.mxu0 0.0
    %971 = vmatprep.subr.mxu0 0.0
    %972 = vmatpush1.msra.mxu0 0.0
    %973 = vmatprep.subr.mxu0 0.0
    %974 = vmatpush1.msra.mxu0 0.0
    %975 = vmatprep.subr.mxu0 0.0
    %976 = vmatpush1.msra.mxu0 0.0
    %977 = vmatprep.subr.mxu0 0.0
    %978 = vmatpush1.msra.mxu0 0.0
    %979 = vmatprep.subr.mxu0 0.0
    %980 = vmatpush1.msra.mxu0 0.0
    %981 = vmatprep.subr.mxu0 0.0
    %982 = vmatpush1.msra.mxu0 0.0
    %983 = vmatprep.subr.mxu0 0.0
    %984 = vmatpush1.msra.mxu0 0.0
    %985 = vmatprep.subr.mxu0 0.0
    %986 = vmatpush1.msra.mxu0 0.0
    %987 = vmatprep.subr.mxu0 0.0
    %988 = vmatpush1.msra.mxu0 0.0
    %989 = vmatprep.subr.mxu0 0.0
    %990 = vmatpush1.msra.mxu0 0.0
    %991 = vmatprep.subr.mxu0 0.0
    %992 = vmatpush1.msra.mxu0 0.0
    %993 = vmatprep.subr.mxu0 0.0
    %994 = vmatpush1.msra.mxu0 0.0
    %995 = vmatprep.subr.mxu0 0.0
    %996 = vmatpush1.msra.mxu0 0.0
    %997 = vmatprep.subr.mxu0 0.0
    %998 = vmatpush1.msra.mxu0 0.0
    %999 = vmatprep.subr.mxu0 0.0
    %1000 = vmatpush1.msra.mxu0 0.0
    %1001 = vmatprep.subr.mxu0 0.0
    %1002 = vmatpush1.msra.mxu0 0.0
    %1003 = vmatprep.subr.mxu0 0.0
    %1004 = vmatpush1.msra.mxu0 0.0
    %1005 = vmatprep.subr.mxu0 0.0
    %1006 = vmatpush1.msra.mxu0 0.0
    %1007 = vmatprep.mubr.f32.mxu0 0.0
    %1008 = vmatmul.mubr.f32.gmra.mrb[0].mxu0 %v941
    %v1009 = vpop.f32.mrb[0].mxu0
    %v1010 = vadd.f32 0.0, %v1009
    %v1011 = vpop.f32.mrb[0].mxu0
    %1012 = vdwg.mxu0
    %v1014 = vrot.slane %v1010, 2
    %v1016 = vadd.f32 %v150, %v1014
    %v1017 = vxor.u32 %v1016, 2147483648
    %v1018 = vmul.f32 %v1017, 1.442695
    %v1019 = vpow.pop %v1018
    %v1020 = vadd.f32 %v1019, 1.0
    %v1021 = vrcp.pop %v1020
    %v1022 = vmul.f32 1.0, %v1021
    %v1023 = vadd.f32 %v1010, %v237
    %v1025 = vrot.slane %v1023, 2
    %1026 = vrot.lane.b32.xlu0 %v1025, 64
    %v1027 = vpop.permute.xlu0 %1026
    %v1029 = vmul.f32 %v1022, %v1027
    %1031 = vrot.lane.b32.xlu0 %v1029, 64
    %v1032 = vpop.permute.xlu0 %1031
    %v1034 = vadd.f32 %v150, %v1032
    %v1035 = vtanh.pop %v1034
    %v1036 = vsub.f32 1.0, %v1022
    %1038 = vrot.lane.b32.xlu0 %v1035, 96
    %v1039 = vpop.permute.xlu0 %1038
    %v1041 = vmul.f32 %v1036, %v1039
    %v1042 = vrot.slane %v932, 6
    %v1044 = vmul.f32 %v1022, %v1042
    %v1045 = vadd.f32 %v1041, %v1044
    %1047 = vrot.lane.b32.xlu0 %v1045, 96
    %v1048 = vpop.permute.xlu0 %1047
    %1050 = vst.msk [vmem:[#allocation2 + $0x8] sm:$0xc0] %vm605, %v1048
    %1051 = vst.msk [vmem:[#allocation8 - $0x6] sm:$0xc0] %vm605, %v1048
    %v1052 = vld [vmem:[#allocation2] sm:$0xff]
    %v1053 = vld [vmem:[#allocation2 + $0x8] sm:$0xff]
    %v1054 = vlaneseq
    %v1055 = vshrl.u32 %v1054, 7
    %v1056 = vsub.s32 0, %v1055
    %v1057 = vrot.slane %v64, %v1056
    %v1059 = vsel %vm154, %v1052, 0
    %v1062 = vsel %vm154, %v1053, 0
    %1064 = vmatprep.subr.mxu0 0.0
    %1065 = vmatpush1.msra.mxu0 %v54
    %1066 = vmatprep.subr.mxu0 0.0
    %1067 = vmatpush1.msra.mxu0 %v55
    %1068 = vmatprep.subr.mxu0 0.0
    %1069 = vmatpush1.msra.mxu0 %v56
    %1070 = vmatprep.subr.mxu0 0.0
    %1071 = vmatpush1.msra.mxu0 %v57
    %1072 = vmatprep.subr.mxu0 0.0
    %1073 = vmatpush1.msra.mxu0 0.0
    %1074 = vmatprep.subr.mxu0 0.0
    %1075 = vmatpush1.msra.mxu0 0.0
    %1076 = vmatprep.subr.mxu0 0.0
    %1077 = vmatpush1.msra.mxu0 0.0
    %1078 = vmatprep.subr.mxu0 0.0
    %1079 = vmatpush1.msra.mxu0 0.0
    %1080 = vmatprep.subr.mxu0 0.0
    %1081 = vmatpush1.msra.mxu0 0.0
    %1082 = vmatprep.subr.mxu0 0.0
    %1083 = vmatpush1.msra.mxu0 0.0
    %1084 = vmatprep.subr.mxu0 0.0
    %1085 = vmatpush1.msra.mxu0 0.0
    %1086 = vmatprep.subr.mxu0 0.0
    %1087 = vmatpush1.msra.mxu0 0.0
    %1088 = vmatprep.subr.mxu0 0.0
    %1089 = vmatpush1.msra.mxu0 0.0
    %1090 = vmatprep.subr.mxu0 0.0
    %1091 = vmatpush1.msra.mxu0 0.0
    %1092 = vmatprep.subr.mxu0 0.0
    %1093 = vmatpush1.msra.mxu0 0.0
    %1094 = vmatprep.subr.mxu0 0.0
    %1095 = vmatpush1.msra.mxu0 0.0
    %1096 = vmatprep.subr.mxu0 0.0
    %1097 = vmatpush1.msra.mxu0 0.0
    %1098 = vmatprep.subr.mxu0 0.0
    %1099 = vmatpush1.msra.mxu0 0.0
    %1100 = vmatprep.subr.mxu0 0.0
    %1101 = vmatpush1.msra.mxu0 0.0
    %1102 = vmatprep.subr.mxu0 0.0
    %1103 = vmatpush1.msra.mxu0 0.0
    %1104 = vmatprep.subr.mxu0 0.0
    %1105 = vmatpush1.msra.mxu0 0.0
    %1106 = vmatprep.subr.mxu0 0.0
    %1107 = vmatpush1.msra.mxu0 0.0
    %1108 = vmatprep.subr.mxu0 0.0
    %1109 = vmatpush1.msra.mxu0 0.0
    %1110 = vmatprep.subr.mxu0 0.0
    %1111 = vmatpush1.msra.mxu0 0.0
    %1112 = vmatprep.subr.mxu0 0.0
    %1113 = vmatpush1.msra.mxu0 0.0
    %1114 = vmatprep.subr.mxu0 0.0
    %1115 = vmatpush1.msra.mxu0 0.0
    %1116 = vmatprep.subr.mxu0 0.0
    %1117 = vmatpush1.msra.mxu0 0.0
    %1118 = vmatprep.subr.mxu0 0.0
    %1119 = vmatpush1.msra.mxu0 0.0
    %1120 = vmatprep.subr.mxu0 0.0
    %1121 = vmatpush1.msra.mxu0 0.0
    %1122 = vmatprep.subr.mxu0 0.0
    %1123 = vmatpush1.msra.mxu0 0.0
    %1124 = vmatprep.subr.mxu0 0.0
    %1125 = vmatpush1.msra.mxu0 0.0
    %1126 = vmatprep.subr.mxu0 0.0
    %1127 = vmatpush1.msra.mxu0 0.0
    %1128 = vmatprep.mubr.f32.mxu0 0.0
    %1129 = vmatmul.mubr.f32.gmra.mrb[0].mxu0 %v1059
    %v1130 = vpop.f32.mrb[0].mxu0
    %v1131 = vadd.f32 %v1057, %v1130
    %v1132 = vpop.f32.mrb[0].mxu0
    %1133 = vmatprep.mubr.f32.mxu0 0.0
    %1134 = vmatmul.mubr.f32.gmra.mrb[0].mxu0 %v1062
    %v1135 = vpop.f32.mrb[0].mxu0
    %v1136 = vadd.f32 %v1057, %v1135
    %v1137 = vpop.f32.mrb[0].mxu0
    %1138 = vdwg.mxu0
    %vm1139 = vcmask 64512
    %1140 = vst.msk [vmem:[%s4] sm:$0xff] %vm1139, %v1131
    %1141 = vst.msk [vmem:[%s4 + $0x8] sm:$0xff] %vm1139, %v1136
    // Predicated region
    $region26: #{tpu_custom_call.1} parent=1 // pred_check
      _
    $region27: #{tpu_custom_call.1} parent=1 // pred_check_branch
      %1143 = sbr.rel (0) target = $region29
    $region28: #{tpu_custom_call.1} parent=1 // pred_region
      _
    $region29: #{tpu_custom_call.1} parent=1 // pred_fallthru
      _
    // Predicated region
    $region30: #{tpu_custom_call.1} parent=1 // pred_check
      _
    $region31: #{tpu_custom_call.1} parent=1 // pred_check_branch
      %1145 = sbr.rel (0) target = $region33
    $region32: #{tpu_custom_call.1} parent=1 // pred_region
      %s1147 = ssub.s32 32, 32
      %1148 = vsyncadd [#allocation5], %s1147
      %s1150 = sshll.u32 [#allocation8], 4
      %s1151 = int_to_ptr.vmem [resolvable:$true] %s1150
      %1153 = dma.vmem_to_hbm [thread:$0]  %s1151, 32, %s5, [#allocation5]
    $region33: #{tpu_custom_call.1} parent=1 // pred_fallthru
      _
    // Predicated region
    $region34: #{tpu_custom_call.1} parent=1 // pred_check
      _
    $region35: #{tpu_custom_call.1} parent=1 // pred_check_branch
      %1155 = sbr.rel (0) target = $region37
    $region36: #{tpu_custom_call.1} parent=1 // pred_region
      _
    $region37: #{tpu_custom_call.1} parent=1 // pred_fallthru
      _
    // Predicated region
    $region38: #{tpu_custom_call.1} parent=1 // pred_check
      _
    $region39: #{tpu_custom_call.1} parent=1 // pred_check_branch
      %1157 = sbr.rel (0) target = $region41
    $region40: #{tpu_custom_call.1} parent=1 // pred_region
      %1158 = dma.done [#allocation5], 32
    $region41: #{tpu_custom_call.1} parent=1 // pred_fallthru
      _
    %1159 = vsyncpa [#allocation4], 1
    %1160 = vsyncpa [#allocation7], 1
    %1161 = vsyncpa [#allocation5], 1

</llo_original>
